<compile_context>
chip_gen: v6e
topology: v6e:2x2x1
jax: 0.10.0
libtpu: 0.0.40
codegen_flags: <defaults>
</compile_context>

<pallas_src>
import functools
import numpy as np
import jax
import jax.numpy as jnp
from jax.experimental import pallas as pl
from jax.experimental.pallas import tpu as pltpu


# ------------------------- in-kernel helpers -------------------------

def _layernorm(x, g, b, eps=1e-6):
    mu = jnp.mean(x, axis=-1, keepdims=True)
    var = jnp.mean(jnp.square(x - mu), axis=-1, keepdims=True)
    return (x - mu) * jax.lax.rsqrt(var + eps) * g + b


# ------------------------- fused ViT forward kernel -------------------------

def _vit_fused_kernel(patch_ref, clsp_ref, posp_ref, pw_ref, pb_ref,
                      g1_ref, b1_ref, qkvw_ref, qkvb_ref, projw_ref, projb_ref,
                      g2_ref, b2_ref, fc1w_ref, fc1b_ref, fc2w_ref, fc2b_ref,
                      lnf_g_ref, lnf_b_ref,
                      cls_out_ref, patch_out_ref,
                      *, bb, n, s, d, heads, scale):
    """Whole ViT-block forward for `bb` batch elements (tokens flattened into rows)."""
    dh = d // heads
    bf16 = jnp.bfloat16

    # ---- patch embed: one flattened (bb*n, Cpp) @ (Cpp, d) matmul + bias ----
    emb = jnp.dot(patch_ref[...], pw_ref[...],
                  preferred_element_type=jnp.float32) + pb_ref[...]        # (bb*n, d) f32

    # ---- assemble token slab per batch element: [cls+pos0 ; patches+pos] ----
    tok_parts = []
    for b in range(bb):
        rows = emb[b * n:(b + 1) * n, :] + posp_ref[...]                   # (n, d)
        tok_parts.append(jnp.concatenate([clsp_ref[...], rows], axis=0))   # (s, d)
    tok = jnp.concatenate(tok_parts, axis=0)                               # (bb*s, d)

    # ---- LN1 + fused QKV projection on flattened rows ----
    h1 = _layernorm(tok, g1_ref[...], b1_ref[...])
    qkv = jnp.dot(h1.astype(bf16), qkvw_ref[...],
                  preferred_element_type=jnp.float32) + qkvb_ref[...]      # (bb*s, 3d)

    # ---- multi-head attention (softmax is per batch element) ----
    attn_parts = []
    for b in range(bb):
        qkv_b = qkv[b * s:(b + 1) * s, :]                                  # (s, 3d)
        head_outs = []
        for hh in range(heads):
            q = (qkv_b[:, hh * dh:(hh + 1) * dh] * scale).astype(bf16)     # (s, dh)
            k = qkv_b[:, d + hh * dh:d + (hh + 1) * dh].astype(bf16)       # (s, dh)
            v = qkv_b[:, 2 * d + hh * dh:2 * d + (hh + 1) * dh].astype(bf16)
            sc = jax.lax.dot_general(q, k, (((1,), (1,)), ((), ())),
                                     preferred_element_type=jnp.float32)   # (s, s)
            m = jnp.max(sc, axis=-1, keepdims=True)
            p = jnp.exp(sc - m)
            inv = pl.reciprocal(jnp.sum(p, axis=-1, keepdims=True), approx=True)
            head_outs.append(jnp.dot(p.astype(bf16), v,
                                     preferred_element_type=jnp.float32) * inv)
        # merge heads along lanes -> one full-width (s, d) slab per batch element
        attn_parts.append(jnp.concatenate(head_outs, axis=1))
    attn = jnp.concatenate(attn_parts, axis=0)                             # (bb*s, d)

    # single full-K output projection + residual
    y = jnp.dot(attn.astype(bf16), projw_ref[...],
                preferred_element_type=jnp.float32) + projb_ref[...]
    tok = tok + y

    # ---- LN2 + MLP + residual + final LayerNorm ----
    h2 = _layernorm(tok, g2_ref[...], b2_ref[...])
    m1 = jnp.dot(h2.astype(bf16), fc1w_ref[...],
                 preferred_element_type=jnp.float32) + fc1b_ref[...]       # (bb*s, hid)
    # TODO(synk): timm nn.GELU is exact-erf; tanh approximation used (not bit-matched).
    m1 = jax.nn.gelu(m1, approximate=True)
    m2 = jnp.dot(m1.astype(bf16), fc2w_ref[...],
                 preferred_element_type=jnp.float32) + fc2b_ref[...]       # (bb*s, d)
    tok = tok + m2
    feat = _layernorm(tok, lnf_g_ref[...], lnf_b_ref[...])                 # (bb*s, d)

    # ---- emit cls / patch tokens as aligned, lane-dense outputs ----
    cls_rows = jnp.concatenate([feat[b * s:b * s + 1, :] for b in range(bb)], axis=0)
    patch_rows = jnp.concatenate([feat[b * s + 1:(b + 1) * s, :] for b in range(bb)],
                                 axis=0)
    cls_out_ref[...] = cls_rows.reshape(bb, 1, d)
    patch_out_ref[...] = patch_rows.reshape(bb, n, d)


# ------------------------- BlockSpec helpers -------------------------

def _bcast_spec(shape):
    """Whole-array block, identical for every grid step (weights stay VMEM-resident)."""
    zeros = (0,) * len(shape)
    return pl.BlockSpec(shape, lambda g, z=zeros: z)


# ------------------------- synthetic ViT backbone -------------------------

def init_vit_params(key, cfg):
    """Deterministic synthetic weights (shapes of a tiny ViT backbone).

    Matmul weights are stored in bf16 (MXU-native); LN/bias/pos params stay f32.
    Positional embedding is stored pre-split into cls row and patch table.
    """
    C, p, D = cfg['in_chans'], cfg['patch'], cfg['dim']
    hid = cfg['mlp_ratio'] * D
    N = (cfg['img_size'] // p) ** 2
    Cpp = C * p * p
    ks = jax.random.split(key, 8)
    bf = jnp.bfloat16
    return {
        'patch_w': (0.02 * jax.random.normal(ks[0], (Cpp, D), jnp.float32)).astype(bf),
        'patch_b': jnp.zeros((1, D), jnp.float32),
        'cls': 0.02 * jax.random.normal(ks[1], (1, D), jnp.float32),
        'pos_cls': 0.02 * jax.random.normal(ks[2], (1, D), jnp.float32),
        'pos_patch': 0.02 * jax.random.normal(ks[7], (N, D), jnp.float32),
        'ln1_g': jnp.ones((1, D), jnp.float32), 'ln1_b': jnp.zeros((1, D), jnp.float32),
        'qkv_w': (0.02 * jax.random.normal(ks[3], (D, 3 * D), jnp.float32)).astype(bf),
        'qkv_b': jnp.zeros((1, 3 * D), jnp.float32),
        'proj_w': (0.02 * jax.random.normal(ks[4], (D, D), jnp.float32)).astype(bf),
        'proj_b': jnp.zeros((1, D), jnp.float32),
        'ln2_g': jnp.ones((1, D), jnp.float32), 'ln2_b': jnp.zeros((1, D), jnp.float32),
        'fc1_w': (0.02 * jax.random.normal(ks[5], (D, hid), jnp.float32)).astype(bf),
        'fc1_b': jnp.zeros((1, hid), jnp.float32),
        'fc2_w': (0.02 * jax.random.normal(ks[6], (hid, D), jnp.float32)).astype(bf),
        'fc2_b': jnp.zeros((1, D), jnp.float32),
        'lnf_g': jnp.ones((1, D), jnp.float32), 'lnf_b': jnp.zeros((1, D), jnp.float32),
        # TimmModel also defines logit_scale; it is not used in forward.
        'logit_scale': jnp.asarray(np.log(1.0 / 0.07), jnp.float32),
    }


def vit_forward_features(params, x, cfg):
    """timm ViT forward_features -> (cls (B,D), patches (B,N,D)) in ONE fused Pallas kernel."""
    B, C, H, W = x.shape
    p, D, Hh = cfg['patch'], cfg['dim'], cfg['heads']
    hid = cfg['mlp_ratio'] * D
    Dh = D // Hh
    gh, gw = H // p, W // p
    N = gh * gw
    S = N + 1
    Cpp = C * p * p
    scale = 1.0 / float(np.sqrt(Dh))

    # Two grid steps (one per v7x TensorCore); each step handles B/G flattened batch
    # elements. On single-TC v5e/v6e this is just a 2-iteration loop (vs 3*B before).
    G = 2 if (B >= 2 and B % 2 == 0) else 1
    BB = B // G

    # TODO(synk): patch extraction could be folded into the kernel via an Element-indexed
    # BlockSpec over the NCHW image; it is a small one-time layout op on a tiny image here.
    patches = (x.reshape(B, C, gh, p, gw, p)
                 .transpose(0, 2, 4, 1, 3, 5)
                 .reshape(B * N, Cpp)
                 .astype(jnp.bfloat16))                    # bf16 halves the input DMA

    cls_pos0 = params['cls'] + params['pos_cls']           # fold cls token + pos[0], (1, D)

    kernel = functools.partial(_vit_fused_kernel, bb=BB, n=N, s=S, d=D,
                               heads=Hh, scale=scale)

    cls_out, patch_out = pl.pallas_call(
        kernel,
        grid=(G,),
        in_specs=[
            pl.BlockSpec((BB * N, Cpp), lambda g: (g, 0)),   # per-step patch rows
            _bcast_spec((1, D)),                             # cls + pos[0]
            _bcast_spec((N, D)),                             # pos (patch rows)
            _bcast_spec((Cpp, D)), _bcast_spec((1, D)),      # patch embed W, b
            _bcast_spec((1, D)), _bcast_spec((1, D)),        # LN1 g, b
            _bcast_spec((D, 3 * D)), _bcast_spec((1, 3 * D)),  # QKV W, b
            _bcast_spec((D, D)), _bcast_spec((1, D)),        # proj W, b
            _bcast_spec((1, D)), _bcast_spec((1, D)),        # LN2 g, b
            _bcast_spec((D, hid)), _bcast_spec((1, hid)),    # fc1 W, b
            _bcast_spec((hid, D)), _bcast_spec((1, D)),      # fc2 W, b
            _bcast_spec((1, D)), _bcast_spec((1, D)),        # final LN g, b
        ],
        out_specs=[
            pl.BlockSpec((BB, 1, D), lambda g: (g, 0, 0)),   # cls tokens
            pl.BlockSpec((BB, N, D), lambda g: (g, 0, 0)),   # patch tokens
        ],
        out_shape=[
            jax.ShapeDtypeStruct((B, 1, D), jnp.float32),
            jax.ShapeDtypeStruct((B, N, D), jnp.float32),
        ],
        compiler_params=pltpu.CompilerParams(
            dimension_semantics=("parallel",),               # split across v7x's 2 TCs
            vmem_limit_bytes=32 * 1024 * 1024),
    )(patches, cls_pos0, params['pos_patch'], params['patch_w'], params['patch_b'],
      params['ln1_g'], params['ln1_b'], params['qkv_w'], params['qkv_b'],
      params['proj_w'], params['proj_b'],
      params['ln2_g'], params['ln2_b'], params['fc1_w'], params['fc1_b'],
      params['fc2_w'], params['fc2_b'], params['lnf_g'], params['lnf_b'])

    return cls_out[:, 0, :], patch_out


# ------------------------- DINOModel forward -------------------------

def dino_forward(student_params, x, cfg):
    """DINOModel.forward(x) == student(x) == (cls_token, patch_tokens)."""
    # rank-3 features => TimmModel's dim()==3 branch (cls = row 0, patches = rows 1:).
    cls_token, patch_tokens = vit_forward_features(student_params, x, cfg)
    return cls_token, patch_tokens


# ------------------------- pure-JAX reference (mirrors the bf16 matmul casts) ----------

def _ref_forward(params, x, cfg):
    B, C, H, W = x.shape
    p, D, Hh = cfg['patch'], cfg['dim'], cfg['heads']
    Dh = D // Hh
    gh, gw = H // p, W // p
    N = gh * gw
    bf = jnp.bfloat16

    def ln(v, g, b):
        mu = v.mean(-1, keepdims=True)
        var = ((v - mu) ** 2).mean(-1, keepdims=True)
        return (v - mu) * jax.lax.rsqrt(var + 1e-6) * g + b

    patches = (x.reshape(B, C, gh, p, gw, p).transpose(0, 2, 4, 1, 3, 5)
                 .reshape(B, N, C * p * p))
    emb = jnp.einsum('bnk,kd->bnd', patches.astype(bf), params['patch_w'],
                     preferred_element_type=jnp.float32) + params['patch_b']
    emb = emb + params['pos_patch'][None]
    cls = jnp.broadcast_to((params['cls'] + params['pos_cls'])[None], (B, 1, D))
    tok = jnp.concatenate([cls, emb], axis=1)
    S = tok.shape[1]

    h = ln(tok, params['ln1_g'], params['ln1_b'])
    qkv = jnp.einsum('bsd,de->bse', h.astype(bf), params['qkv_w'],
                     preferred_element_type=jnp.float32) + params['qkv_b']
    qkv = qkv.reshape(B, S, 3, Hh, Dh).transpose(2, 0, 3, 1, 4)
    q, k, v = qkv[0], qkv[1], qkv[2]                      # (B, Hh, S, Dh)
    s = jnp.einsum('bhqd,bhkd->bhqk', (q / np.sqrt(Dh)).astype(bf), k.astype(bf),
                   preferred_element_type=jnp.float32)
    pmat = jax.nn.softmax(s, axis=-1)
    o = jnp.einsum('bhqk,bhkd->bhqd', pmat.astype(bf), v.astype(bf),
                   preferred_element_type=jnp.float32)
    o = o.transpose(0, 2, 1, 3).reshape(B, S, D)
    o = jnp.einsum('bsd,de->bse', o.astype(bf), params['proj_w'],
                   preferred_element_type=jnp.float32) + params['proj_b']
    tok = tok + o

    h = ln(tok, params['ln2_g'], params['ln2_b'])
    h = jax.nn.gelu(jnp.einsum('bsd,dh->bsh', h.astype(bf), params['fc1_w'],
                               preferred_element_type=jnp.float32) + params['fc1_b'],
                    approximate=True)
    h = jnp.einsum('bsh,hd->bsd', h.astype(bf), params['fc2_w'],
                   preferred_element_type=jnp.float32) + params['fc2_b']
    tok = tok + h
    feat = ln(tok, params['lnf_g'], params['lnf_b'])
    return feat[:, 0], feat[:, 1:]


if __name__ == "__main__":
    cfg = dict(img_size=32, patch=8, in_chans=3, dim=128, heads=2, mlp_ratio=4)

    key = jax.random.PRNGKey(0)
    k_student, k_teacher, k_x = jax.random.split(key, 3)
    student_params = init_vit_params(k_student, cfg)
    # Teacher branch exists in __init__ but is not used in forward (frozen EMA copy).
    teacher_params = init_vit_params(k_teacher, cfg)
    # TODO(synk): update_teacher() (EMA momentum update) is not part of forward; not implemented.

    x = jax.random.normal(k_x, (2, cfg['in_chans'], cfg['img_size'], cfg['img_size']),
                          jnp.float32)

    fwd = jax.jit(functools.partial(dino_forward, cfg=cfg))
    cls_tok, patch_tok = fwd(student_params, x)
    jax.block_until_ready((cls_tok, patch_tok))

    n_patches = (cfg['img_size'] // cfg['patch']) ** 2
    assert cls_tok.shape == (2, cfg['dim'])
    assert patch_tok.shape == (2, n_patches, cfg['dim'])

    # Numerical sanity check against a pure-JAX reference with matching bf16 matmul casts.
    ref_cls, ref_patch = jax.jit(functools.partial(_ref_forward, cfg=cfg))(student_params, x)
    np.testing.assert_allclose(np.asarray(cls_tok), np.asarray(ref_cls),
                               atol=5e-2, rtol=5e-2)
    np.testing.assert_allclose(np.asarray(patch_tok), np.asarray(ref_patch),
                               atol=5e-2, rtol=5e-2)

    print("KERNEL_OK")
</pallas_src>

<mosaic_0001>
module attributes {stable_mosaic.version = 11 : i64} {
  func.func @_vit_fused_kernel(%arg0: i32, %arg1: memref<16x192xbf16, #tpu.memory_space<vmem>>, %arg2: memref<1x128xf32, #tpu.memory_space<vmem>>, %arg3: memref<16x128xf32, #tpu.memory_space<vmem>>, %arg4: memref<192x128xbf16, #tpu.memory_space<vmem>>, %arg5: memref<1x128xf32, #tpu.memory_space<vmem>>, %arg6: memref<1x128xf32, #tpu.memory_space<vmem>>, %arg7: memref<1x128xf32, #tpu.memory_space<vmem>>, %arg8: memref<128x384xbf16, #tpu.memory_space<vmem>>, %arg9: memref<1x384xf32, #tpu.memory_space<vmem>>, %arg10: memref<128x128xbf16, #tpu.memory_space<vmem>>, %arg11: memref<1x128xf32, #tpu.memory_space<vmem>>, %arg12: memref<1x128xf32, #tpu.memory_space<vmem>>, %arg13: memref<1x128xf32, #tpu.memory_space<vmem>>, %arg14: memref<128x512xbf16, #tpu.memory_space<vmem>>, %arg15: memref<1x512xf32, #tpu.memory_space<vmem>>, %arg16: memref<512x128xbf16, #tpu.memory_space<vmem>>, %arg17: memref<1x128xf32, #tpu.memory_space<vmem>>, %arg18: memref<1x128xf32, #tpu.memory_space<vmem>>, %arg19: memref<1x128xf32, #tpu.memory_space<vmem>>, %arg20: memref<1x1x128xf32, #tpu.memory_space<vmem>>, %arg21: memref<1x16x128xf32, #tpu.memory_space<vmem>>) attributes {dimension_semantics = [#tpu.dimension_semantics<parallel>], iteration_bounds = array<i64: 2>, scalar_prefetch = 0 : i64, scratch_operands = 0 : i64, tpu.core_type = #tpu.core_type<tc>, window_params = [{transform_indices = @transform_0, window_bounds = array<i64: 16, 192>}, {pipeline_mode = #tpu.pipeline_mode<synchronous>, transform_indices = @transform_1, window_bounds = array<i64: 1, 128>}, {pipeline_mode = #tpu.pipeline_mode<synchronous>, transform_indices = @transform_2, window_bounds = array<i64: 16, 128>}, {pipeline_mode = #tpu.pipeline_mode<synchronous>, transform_indices = @transform_3, window_bounds = array<i64: 192, 128>}, {pipeline_mode = #tpu.pipeline_mode<synchronous>, transform_indices = @transform_4, window_bounds = array<i64: 1, 128>}, {pipeline_mode = #tpu.pipeline_mode<synchronous>, transform_indices = @transform_5, window_bounds = array<i64: 1, 128>}, {pipeline_mode = #tpu.pipeline_mode<synchronous>, transform_indices = @transform_6, window_bounds = array<i64: 1, 128>}, {pipeline_mode = #tpu.pipeline_mode<synchronous>, transform_indices = @transform_7, window_bounds = array<i64: 128, 384>}, {pipeline_mode = #tpu.pipeline_mode<synchronous>, transform_indices = @transform_8, window_bounds = array<i64: 1, 384>}, {pipeline_mode = #tpu.pipeline_mode<synchronous>, transform_indices = @transform_9, window_bounds = array<i64: 128, 128>}, {pipeline_mode = #tpu.pipeline_mode<synchronous>, transform_indices = @transform_10, window_bounds = array<i64: 1, 128>}, {pipeline_mode = #tpu.pipeline_mode<synchronous>, transform_indices = @transform_11, window_bounds = array<i64: 1, 128>}, {pipeline_mode = #tpu.pipeline_mode<synchronous>, transform_indices = @transform_12, window_bounds = array<i64: 1, 128>}, {pipeline_mode = #tpu.pipeline_mode<synchronous>, transform_indices = @transform_13, window_bounds = array<i64: 128, 512>}, {pipeline_mode = #tpu.pipeline_mode<synchronous>, transform_indices = @transform_14, window_bounds = array<i64: 1, 512>}, {pipeline_mode = #tpu.pipeline_mode<synchronous>, transform_indices = @transform_15, window_bounds = array<i64: 512, 128>}, {pipeline_mode = #tpu.pipeline_mode<synchronous>, transform_indices = @transform_16, window_bounds = array<i64: 1, 128>}, {pipeline_mode = #tpu.pipeline_mode<synchronous>, transform_indices = @transform_17, window_bounds = array<i64: 1, 128>}, {pipeline_mode = #tpu.pipeline_mode<synchronous>, transform_indices = @transform_18, window_bounds = array<i64: 1, 128>}, {transform_indices = @transform_19, window_bounds = array<i64: 1, 1, 128>}, {transform_indices = @transform_20, window_bounds = array<i64: 1, 16, 128>}]} {
    %c0 = arith.constant 0 : index
    %c0_0 = arith.constant 0 : index
    %0 = vector.load %arg1[%c0, %c0_0] : memref<16x192xbf16, #tpu.memory_space<vmem>>, vector<16x192xbf16>
    %c0_1 = arith.constant 0 : index
    %c0_2 = arith.constant 0 : index
    %1 = vector.load %arg4[%c0_1, %c0_2] : memref<192x128xbf16, #tpu.memory_space<vmem>>, vector<192x128xbf16>
    %cst = arith.constant dense<0.000000e+00> : vector<16x128xf32>
    %2 = tpu.matmul %0, %1, %cst {dimension_numbers = #tpu.dot_dimension_numbers<[1], [0], [0], [1], [0, 0, 1, 1], [], []>} : vector<16x192xbf16>, vector<192x128xbf16>, vector<16x128xf32> -> vector<16x128xf32>
    %c0_3 = arith.constant 0 : index
    %c0_4 = arith.constant 0 : index
    %3 = vector.load %arg5[%c0_3, %c0_4] : memref<1x128xf32, #tpu.memory_space<vmem>>, vector<1x128xf32>
    %4 = vector.broadcast %3 : vector<1x128xf32> to vector<16x128xf32>
    %5 = arith.addf %2, %4 : vector<16x128xf32>
    %c0_5 = arith.constant 0 : index
    %c0_6 = arith.constant 0 : index
    %6 = vector.load %arg3[%c0_5, %c0_6] : memref<16x128xf32, #tpu.memory_space<vmem>>, vector<16x128xf32>
    %7 = arith.addf %5, %6 : vector<16x128xf32>
    %c0_7 = arith.constant 0 : index
    %c0_8 = arith.constant 0 : index
    %8 = vector.load %arg2[%c0_7, %c0_8] : memref<1x128xf32, #tpu.memory_space<vmem>>, vector<1x128xf32>
    %9 = tpu.concatenate %8, %7 in 0 : vector<1x128xf32>, vector<16x128xf32> -> vector<17x128xf32>
    %c0_9 = arith.constant 0 : index
    %c0_10 = arith.constant 0 : index
    %10 = vector.load %arg6[%c0_9, %c0_10] : memref<1x128xf32, #tpu.memory_space<vmem>>, vector<1x128xf32>
    %c0_11 = arith.constant 0 : index
    %c0_12 = arith.constant 0 : index
    %11 = vector.load %arg7[%c0_11, %c0_12] : memref<1x128xf32, #tpu.memory_space<vmem>>, vector<1x128xf32>
    %cst_13 = arith.constant dense<0.000000e+00> : vector<17xf32>
    %12 = vector.multi_reduction <add>, %9, %cst_13 [1] : vector<17x128xf32> to vector<17xf32>
    %13 = vector.shape_cast %12 : vector<17xf32> to vector<17x1xf32>
    %cst_14 = arith.constant 1.280000e+02 : f32
    %14 = vector.broadcast %cst_14 : f32 to vector<17x1xf32>
    %15 = arith.divf %13, %14 : vector<17x1xf32>
    %16 = vector.broadcast %15 : vector<17x1xf32> to vector<17x128xf32>
    %17 = arith.subf %9, %16 : vector<17x128xf32>
    %18 = arith.mulf %17, %17 : vector<17x128xf32>
    %cst_15 = arith.constant dense<0.000000e+00> : vector<17xf32>
    %19 = vector.multi_reduction <add>, %18, %cst_15 [1] : vector<17x128xf32> to vector<17xf32>
    %20 = vector.shape_cast %19 : vector<17xf32> to vector<17x1xf32>
    %cst_16 = arith.constant 1.280000e+02 : f32
    %21 = vector.broadcast %cst_16 : f32 to vector<17x1xf32>
    %22 = arith.divf %20, %21 : vector<17x1xf32>
    %23 = vector.broadcast %15 : vector<17x1xf32> to vector<17x128xf32>
    %24 = arith.subf %9, %23 : vector<17x128xf32>
    %cst_17 = arith.constant 9.99999997E-7 : f32
    %25 = vector.broadcast %cst_17 : f32 to vector<17x1xf32>
    %26 = arith.addf %22, %25 : vector<17x1xf32>
    %27 = math.rsqrt %26 : vector<17x1xf32>
    %28 = vector.broadcast %27 : vector<17x1xf32> to vector<17x128xf32>
    %29 = arith.mulf %24, %28 : vector<17x128xf32>
    %30 = vector.broadcast %10 : vector<1x128xf32> to vector<17x128xf32>
    %31 = arith.mulf %29, %30 : vector<17x128xf32>
    %32 = vector.broadcast %11 : vector<1x128xf32> to vector<17x128xf32>
    %33 = arith.addf %31, %32 : vector<17x128xf32>
    %34 = arith.truncf %33 : vector<17x128xf32> to vector<17x128xbf16>
    %c0_18 = arith.constant 0 : index
    %c0_19 = arith.constant 0 : index
    %35 = vector.load %arg8[%c0_18, %c0_19] : memref<128x384xbf16, #tpu.memory_space<vmem>>, vector<128x384xbf16>
    %cst_20 = arith.constant dense<0.000000e+00> : vector<17x384xf32>
    %36 = tpu.matmul %34, %35, %cst_20 {dimension_numbers = #tpu.dot_dimension_numbers<[1], [0], [0], [1], [0, 0, 1, 1], [], []>} : vector<17x128xbf16>, vector<128x384xbf16>, vector<17x384xf32> -> vector<17x384xf32>
    %c0_21 = arith.constant 0 : index
    %c0_22 = arith.constant 0 : index
    %37 = vector.load %arg9[%c0_21, %c0_22] : memref<1x384xf32, #tpu.memory_space<vmem>>, vector<1x384xf32>
    %38 = vector.broadcast %37 : vector<1x384xf32> to vector<17x384xf32>
    %39 = arith.addf %36, %38 : vector<17x384xf32>
    %40 = vector.extract_strided_slice %39 {offsets = [0, 0], sizes = [17, 64], strides = [1, 1]} : vector<17x384xf32> to vector<17x64xf32>
    %cst_23 = arith.constant 1.250000e-01 : f32
    %41 = vector.broadcast %cst_23 : f32 to vector<17x64xf32>
    %42 = arith.mulf %40, %41 : vector<17x64xf32>
    %43 = arith.truncf %42 : vector<17x64xf32> to vector<17x64xbf16>
    %44 = vector.extract_strided_slice %39 {offsets = [0, 128], sizes = [17, 64], strides = [1, 1]} : vector<17x384xf32> to vector<17x64xf32>
    %45 = arith.truncf %44 : vector<17x64xf32> to vector<17x64xbf16>
    %46 = vector.extract_strided_slice %39 {offsets = [0, 256], sizes = [17, 64], strides = [1, 1]} : vector<17x384xf32> to vector<17x64xf32>
    %47 = arith.truncf %46 : vector<17x64xf32> to vector<17x64xbf16>
    %cst_24 = arith.constant dense<0.000000e+00> : vector<17x17xf32>
    %48 = tpu.matmul %43, %45, %cst_24 {dimension_numbers = #tpu.dot_dimension_numbers<[1], [1], [0], [0], [0, 0, 1, 0], [], []>} : vector<17x64xbf16>, vector<17x64xbf16>, vector<17x17xf32> -> vector<17x17xf32>
    %cst_25 = arith.constant dense<0xFF800000> : vector<17xf32>
    %49 = vector.multi_reduction <maximumf>, %48, %cst_25 [1] : vector<17x17xf32> to vector<17xf32>
    %50 = vector.shape_cast %49 : vector<17xf32> to vector<17x1xf32>
    %51 = vector.broadcast %50 : vector<17x1xf32> to vector<17x17xf32>
    %52 = arith.subf %48, %51 : vector<17x17xf32>
    %53 = math.exp %52 : vector<17x17xf32>
    %cst_26 = arith.constant dense<0.000000e+00> : vector<17xf32>
    %54 = vector.multi_reduction <add>, %53, %cst_26 [1] : vector<17x17xf32> to vector<17xf32>
    %55 = vector.shape_cast %54 : vector<17xf32> to vector<17x1xf32>
    %56 = tpu.reciprocal %55 {approx = true} : vector<17x1xf32> -> vector<17x1xf32>
    %57 = arith.truncf %53 : vector<17x17xf32> to vector<17x17xbf16>
    %cst_27 = arith.constant dense<0.000000e+00> : vector<17x64xf32>
    %58 = tpu.matmul %57, %47, %cst_27 {dimension_numbers = #tpu.dot_dimension_numbers<[1], [0], [0], [1], [0, 0, 1, 1], [], []>} : vector<17x17xbf16>, vector<17x64xbf16>, vector<17x64xf32> -> vector<17x64xf32>
    %59 = vector.broadcast %56 : vector<17x1xf32> to vector<17x64xf32>
    %60 = arith.mulf %58, %59 : vector<17x64xf32>
    %61 = vector.extract_strided_slice %39 {offsets = [0, 64], sizes = [17, 64], strides = [1, 1]} : vector<17x384xf32> to vector<17x64xf32>
    %cst_28 = arith.constant 1.250000e-01 : f32
    %62 = vector.broadcast %cst_28 : f32 to vector<17x64xf32>
    %63 = arith.mulf %61, %62 : vector<17x64xf32>
    %64 = arith.truncf %63 : vector<17x64xf32> to vector<17x64xbf16>
    %65 = vector.extract_strided_slice %39 {offsets = [0, 192], sizes = [17, 64], strides = [1, 1]} : vector<17x384xf32> to vector<17x64xf32>
    %66 = arith.truncf %65 : vector<17x64xf32> to vector<17x64xbf16>
    %67 = vector.extract_strided_slice %39 {offsets = [0, 320], sizes = [17, 64], strides = [1, 1]} : vector<17x384xf32> to vector<17x64xf32>
    %68 = arith.truncf %67 : vector<17x64xf32> to vector<17x64xbf16>
    %cst_29 = arith.constant dense<0.000000e+00> : vector<17x17xf32>
    %69 = tpu.matmul %64, %66, %cst_29 {dimension_numbers = #tpu.dot_dimension_numbers<[1], [1], [0], [0], [0, 0, 1, 0], [], []>} : vector<17x64xbf16>, vector<17x64xbf16>, vector<17x17xf32> -> vector<17x17xf32>
    %cst_30 = arith.constant dense<0xFF800000> : vector<17xf32>
    %70 = vector.multi_reduction <maximumf>, %69, %cst_30 [1] : vector<17x17xf32> to vector<17xf32>
    %71 = vector.shape_cast %70 : vector<17xf32> to vector<17x1xf32>
    %72 = vector.broadcast %71 : vector<17x1xf32> to vector<17x17xf32>
    %73 = arith.subf %69, %72 : vector<17x17xf32>
    %74 = math.exp %73 : vector<17x17xf32>
    %cst_31 = arith.constant dense<0.000000e+00> : vector<17xf32>
    %75 = vector.multi_reduction <add>, %74, %cst_31 [1] : vector<17x17xf32> to vector<17xf32>
    %76 = vector.shape_cast %75 : vector<17xf32> to vector<17x1xf32>
    %77 = tpu.reciprocal %76 {approx = true} : vector<17x1xf32> -> vector<17x1xf32>
    %78 = arith.truncf %74 : vector<17x17xf32> to vector<17x17xbf16>
    %cst_32 = arith.constant dense<0.000000e+00> : vector<17x64xf32>
    %79 = tpu.matmul %78, %68, %cst_32 {dimension_numbers = #tpu.dot_dimension_numbers<[1], [0], [0], [1], [0, 0, 1, 1], [], []>} : vector<17x17xbf16>, vector<17x64xbf16>, vector<17x64xf32> -> vector<17x64xf32>
    %80 = vector.broadcast %77 : vector<17x1xf32> to vector<17x64xf32>
    %81 = arith.mulf %79, %80 : vector<17x64xf32>
    %82 = tpu.concatenate %60, %81 in 1 : vector<17x64xf32>, vector<17x64xf32> -> vector<17x128xf32>
    %83 = arith.truncf %82 : vector<17x128xf32> to vector<17x128xbf16>
    %c0_33 = arith.constant 0 : index
    %c0_34 = arith.constant 0 : index
    %84 = vector.load %arg10[%c0_33, %c0_34] : memref<128x128xbf16, #tpu.memory_space<vmem>>, vector<128x128xbf16>
    %cst_35 = arith.constant dense<0.000000e+00> : vector<17x128xf32>
    %85 = tpu.matmul %83, %84, %cst_35 {dimension_numbers = #tpu.dot_dimension_numbers<[1], [0], [0], [1], [0, 0, 1, 1], [], []>} : vector<17x128xbf16>, vector<128x128xbf16>, vector<17x128xf32> -> vector<17x128xf32>
    %c0_36 = arith.constant 0 : index
    %c0_37 = arith.constant 0 : index
    %86 = vector.load %arg11[%c0_36, %c0_37] : memref<1x128xf32, #tpu.memory_space<vmem>>, vector<1x128xf32>
    %87 = vector.broadcast %86 : vector<1x128xf32> to vector<17x128xf32>
    %88 = arith.addf %85, %87 : vector<17x128xf32>
    %89 = arith.addf %9, %88 : vector<17x128xf32>
    %c0_38 = arith.constant 0 : index
    %c0_39 = arith.constant 0 : index
    %90 = vector.load %arg12[%c0_38, %c0_39] : memref<1x128xf32, #tpu.memory_space<vmem>>, vector<1x128xf32>
    %c0_40 = arith.constant 0 : index
    %c0_41 = arith.constant 0 : index
    %91 = vector.load %arg13[%c0_40, %c0_41] : memref<1x128xf32, #tpu.memory_space<vmem>>, vector<1x128xf32>
    %cst_42 = arith.constant dense<0.000000e+00> : vector<17xf32>
    %92 = vector.multi_reduction <add>, %89, %cst_42 [1] : vector<17x128xf32> to vector<17xf32>
    %93 = vector.shape_cast %92 : vector<17xf32> to vector<17x1xf32>
    %cst_43 = arith.constant 1.280000e+02 : f32
    %94 = vector.broadcast %cst_43 : f32 to vector<17x1xf32>
    %95 = arith.divf %93, %94 : vector<17x1xf32>
    %96 = vector.broadcast %95 : vector<17x1xf32> to vector<17x128xf32>
    %97 = arith.subf %89, %96 : vector<17x128xf32>
    %98 = arith.mulf %97, %97 : vector<17x128xf32>
    %cst_44 = arith.constant dense<0.000000e+00> : vector<17xf32>
    %99 = vector.multi_reduction <add>, %98, %cst_44 [1] : vector<17x128xf32> to vector<17xf32>
    %100 = vector.shape_cast %99 : vector<17xf32> to vector<17x1xf32>
    %cst_45 = arith.constant 1.280000e+02 : f32
    %101 = vector.broadcast %cst_45 : f32 to vector<17x1xf32>
    %102 = arith.divf %100, %101 : vector<17x1xf32>
    %103 = vector.broadcast %95 : vector<17x1xf32> to vector<17x128xf32>
    %104 = arith.subf %89, %103 : vector<17x128xf32>
    %cst_46 = arith.constant 9.99999997E-7 : f32
    %105 = vector.broadcast %cst_46 : f32 to vector<17x1xf32>
    %106 = arith.addf %102, %105 : vector<17x1xf32>
    %107 = math.rsqrt %106 : vector<17x1xf32>
    %108 = vector.broadcast %107 : vector<17x1xf32> to vector<17x128xf32>
    %109 = arith.mulf %104, %108 : vector<17x128xf32>
    %110 = vector.broadcast %90 : vector<1x128xf32> to vector<17x128xf32>
    %111 = arith.mulf %109, %110 : vector<17x128xf32>
    %112 = vector.broadcast %91 : vector<1x128xf32> to vector<17x128xf32>
    %113 = arith.addf %111, %112 : vector<17x128xf32>
    %114 = arith.truncf %113 : vector<17x128xf32> to vector<17x128xbf16>
    %c0_47 = arith.constant 0 : index
    %c0_48 = arith.constant 0 : index
    %115 = vector.load %arg14[%c0_47, %c0_48] : memref<128x512xbf16, #tpu.memory_space<vmem>>, vector<128x512xbf16>
    %cst_49 = arith.constant dense<0.000000e+00> : vector<17x512xf32>
    %116 = tpu.matmul %114, %115, %cst_49 {dimension_numbers = #tpu.dot_dimension_numbers<[1], [0], [0], [1], [0, 0, 1, 1], [], []>} : vector<17x128xbf16>, vector<128x512xbf16>, vector<17x512xf32> -> vector<17x512xf32>
    %c0_50 = arith.constant 0 : index
    %c0_51 = arith.constant 0 : index
    %117 = vector.load %arg15[%c0_50, %c0_51] : memref<1x512xf32, #tpu.memory_space<vmem>>, vector<1x512xf32>
    %118 = vector.broadcast %117 : vector<1x512xf32> to vector<17x512xf32>
    %119 = arith.addf %116, %118 : vector<17x512xf32>
    %120 = arith.mulf %119, %119 : vector<17x512xf32>
    %121 = arith.mulf %119, %120 : vector<17x512xf32>
    %cst_52 = arith.constant 4.471500e-02 : f32
    %122 = vector.broadcast %cst_52 : f32 to vector<17x512xf32>
    %123 = arith.mulf %122, %121 : vector<17x512xf32>
    %124 = arith.addf %119, %123 : vector<17x512xf32>
    %cst_53 = arith.constant 0.797884583 : f32
    %125 = vector.broadcast %cst_53 : f32 to vector<17x512xf32>
    %126 = arith.mulf %125, %124 : vector<17x512xf32>
    %127 = math.tanh %126 : vector<17x512xf32>
    %cst_54 = arith.constant 1.000000e+00 : f32
    %128 = vector.broadcast %cst_54 : f32 to vector<17x512xf32>
    %129 = arith.addf %128, %127 : vector<17x512xf32>
    %cst_55 = arith.constant 5.000000e-01 : f32
    %130 = vector.broadcast %cst_55 : f32 to vector<17x512xf32>
    %131 = arith.mulf %130, %129 : vector<17x512xf32>
    %132 = arith.mulf %119, %131 : vector<17x512xf32>
    %133 = arith.truncf %132 : vector<17x512xf32> to vector<17x512xbf16>
    %c0_56 = arith.constant 0 : index
    %c0_57 = arith.constant 0 : index
    %134 = vector.load %arg16[%c0_56, %c0_57] : memref<512x128xbf16, #tpu.memory_space<vmem>>, vector<512x128xbf16>
    %cst_58 = arith.constant dense<0.000000e+00> : vector<17x128xf32>
    %135 = tpu.matmul %133, %134, %cst_58 {dimension_numbers = #tpu.dot_dimension_numbers<[1], [0], [0], [1], [0, 0, 1, 1], [], []>} : vector<17x512xbf16>, vector<512x128xbf16>, vector<17x128xf32> -> vector<17x128xf32>
    %c0_59 = arith.constant 0 : index
    %c0_60 = arith.constant 0 : index
    %136 = vector.load %arg17[%c0_59, %c0_60] : memref<1x128xf32, #tpu.memory_space<vmem>>, vector<1x128xf32>
    %137 = vector.broadcast %136 : vector<1x128xf32> to vector<17x128xf32>
    %138 = arith.addf %135, %137 : vector<17x128xf32>
    %139 = arith.addf %89, %138 : vector<17x128xf32>
    %c0_61 = arith.constant 0 : index
    %c0_62 = arith.constant 0 : index
    %140 = vector.load %arg18[%c0_61, %c0_62] : memref<1x128xf32, #tpu.memory_space<vmem>>, vector<1x128xf32>
    %c0_63 = arith.constant 0 : index
    %c0_64 = arith.constant 0 : index
    %141 = vector.load %arg19[%c0_63, %c0_64] : memref<1x128xf32, #tpu.memory_space<vmem>>, vector<1x128xf32>
    %cst_65 = arith.constant dense<0.000000e+00> : vector<17xf32>
    %142 = vector.multi_reduction <add>, %139, %cst_65 [1] : vector<17x128xf32> to vector<17xf32>
    %143 = vector.shape_cast %142 : vector<17xf32> to vector<17x1xf32>
    %cst_66 = arith.constant 1.280000e+02 : f32
    %144 = vector.broadcast %cst_66 : f32 to vector<17x1xf32>
    %145 = arith.divf %143, %144 : vector<17x1xf32>
    %146 = vector.broadcast %145 : vector<17x1xf32> to vector<17x128xf32>
    %147 = arith.subf %139, %146 : vector<17x128xf32>
    %148 = arith.mulf %147, %147 : vector<17x128xf32>
    %cst_67 = arith.constant dense<0.000000e+00> : vector<17xf32>
    %149 = vector.multi_reduction <add>, %148, %cst_67 [1] : vector<17x128xf32> to vector<17xf32>
    %150 = vector.shape_cast %149 : vector<17xf32> to vector<17x1xf32>
    %cst_68 = arith.constant 1.280000e+02 : f32
    %151 = vector.broadcast %cst_68 : f32 to vector<17x1xf32>
    %152 = arith.divf %150, %151 : vector<17x1xf32>
    %153 = vector.broadcast %145 : vector<17x1xf32> to vector<17x128xf32>
    %154 = arith.subf %139, %153 : vector<17x128xf32>
    %cst_69 = arith.constant 9.99999997E-7 : f32
    %155 = vector.broadcast %cst_69 : f32 to vector<17x1xf32>
    %156 = arith.addf %152, %155 : vector<17x1xf32>
    %157 = math.rsqrt %156 : vector<17x1xf32>
    %158 = vector.broadcast %157 : vector<17x1xf32> to vector<17x128xf32>
    %159 = arith.mulf %154, %158 : vector<17x128xf32>
    %160 = vector.broadcast %140 : vector<1x128xf32> to vector<17x128xf32>
    %161 = arith.mulf %159, %160 : vector<17x128xf32>
    %162 = vector.broadcast %141 : vector<1x128xf32> to vector<17x128xf32>
    %163 = arith.addf %161, %162 : vector<17x128xf32>
    %164 = vector.extract_strided_slice %163 {offsets = [0, 0], sizes = [1, 128], strides = [1, 1]} : vector<17x128xf32> to vector<1x128xf32>
    %165 = vector.extract_strided_slice %163 {offsets = [1, 0], sizes = [16, 128], strides = [1, 1]} : vector<17x128xf32> to vector<16x128xf32>
    %166 = vector.shape_cast %164 : vector<1x128xf32> to vector<1x1x128xf32>
    %c0_70 = arith.constant 0 : index
    %c0_71 = arith.constant 0 : index
    %c0_72 = arith.constant 0 : index
    %167 = vector.load %arg20[%c0_70, %c0_71, %c0_72] : memref<1x1x128xf32, #tpu.memory_space<vmem>>, vector<1x1x128xf32>
    tpu.vector_store %arg20[%c0_70, %c0_71, %c0_72], %166 {strides = array<i32>} : memref<1x1x128xf32, #tpu.memory_space<vmem>>, vector<1x1x128xf32>,
    %168 = vector.shape_cast %165 : vector<16x128xf32> to vector<1x16x128xf32>
    %c0_73 = arith.constant 0 : index
    %c0_74 = arith.constant 0 : index
    %c0_75 = arith.constant 0 : index
    %169 = vector.load %arg21[%c0_73, %c0_74, %c0_75] : memref<1x16x128xf32, #tpu.memory_space<vmem>>, vector<1x16x128xf32>
    tpu.vector_store %arg21[%c0_73, %c0_74, %c0_75], %168 {strides = array<i32>} : memref<1x16x128xf32, #tpu.memory_space<vmem>>, vector<1x16x128xf32>,
    return
  }
  func.func @transform_0(%arg0: i32) -> (i32, i32) {
    %c0_i32 = arith.constant 0 : i32
    %c0_i32_0 = arith.constant 0 : i32
    return %arg0, %c0_i32 : i32, i32
  }
  func.func @transform_1(%arg0: i32) -> (i32, i32) {
    %c0_i32 = arith.constant 0 : i32
    %c0_i32_0 = arith.constant 0 : i32
    %c0_i32_1 = arith.constant 0 : i32
    return %c0_i32, %c0_i32_0 : i32, i32
  }
  func.func @transform_2(%arg0: i32) -> (i32, i32) {
    %c0_i32 = arith.constant 0 : i32
    %c0_i32_0 = arith.constant 0 : i32
    %c0_i32_1 = arith.constant 0 : i32
    return %c0_i32, %c0_i32_0 : i32, i32
  }
  func.func @transform_3(%arg0: i32) -> (i32, i32) {
    %c0_i32 = arith.constant 0 : i32
    %c0_i32_0 = arith.constant 0 : i32
    %c0_i32_1 = arith.constant 0 : i32
    return %c0_i32, %c0_i32_0 : i32, i32
  }
  func.func @transform_4(%arg0: i32) -> (i32, i32) {
    %c0_i32 = arith.constant 0 : i32
    %c0_i32_0 = arith.constant 0 : i32
    %c0_i32_1 = arith.constant 0 : i32
    return %c0_i32, %c0_i32_0 : i32, i32
  }
  func.func @transform_5(%arg0: i32) -> (i32, i32) {
    %c0_i32 = arith.constant 0 : i32
    %c0_i32_0 = arith.constant 0 : i32
    %c0_i32_1 = arith.constant 0 : i32
    return %c0_i32, %c0_i32_0 : i32, i32
  }
  func.func @transform_6(%arg0: i32) -> (i32, i32) {
    %c0_i32 = arith.constant 0 : i32
    %c0_i32_0 = arith.constant 0 : i32
    %c0_i32_1 = arith.constant 0 : i32
    return %c0_i32, %c0_i32_0 : i32, i32
  }
  func.func @transform_7(%arg0: i32) -> (i32, i32) {
    %c0_i32 = arith.constant 0 : i32
    %c0_i32_0 = arith.constant 0 : i32
    %c0_i32_1 = arith.constant 0 : i32
    return %c0_i32, %c0_i32_0 : i32, i32
  }
  func.func @transform_8(%arg0: i32) -> (i32, i32) {
    %c0_i32 = arith.constant 0 : i32
    %c0_i32_0 = arith.constant 0 : i32
    %c0_i32_1 = arith.constant 0 : i32
    return %c0_i32, %c0_i32_0 : i32, i32
  }
  func.func @transform_9(%arg0: i32) -> (i32, i32) {
    %c0_i32 = arith.constant 0 : i32
    %c0_i32_0 = arith.constant 0 : i32
    %c0_i32_1 = arith.constant 0 : i32
    return %c0_i32, %c0_i32_0 : i32, i32
  }
  func.func @transform_10(%arg0: i32) -> (i32, i32) {
    %c0_i32 = arith.constant 0 : i32
    %c0_i32_0 = arith.constant 0 : i32
    %c0_i32_1 = arith.constant 0 : i32
    return %c0_i32, %c0_i32_0 : i32, i32
  }
  func.func @transform_11(%arg0: i32) -> (i32, i32) {
    %c0_i32 = arith.constant 0 : i32
    %c0_i32_0 = arith.constant 0 : i32
    %c0_i32_1 = arith.constant 0 : i32
    return %c0_i32, %c0_i32_0 : i32, i32
  }
  func.func @transform_12(%arg0: i32) -> (i32, i32) {
    %c0_i32 = arith.constant 0 : i32
    %c0_i32_0 = arith.constant 0 : i32
    %c0_i32_1 = arith.constant 0 : i32
    return %c0_i32, %c0_i32_0 : i32, i32
  }
  func.func @transform_13(%arg0: i32) -> (i32, i32) {
    %c0_i32 = arith.constant 0 : i32
    %c0_i32_0 = arith.constant 0 : i32
    %c0_i32_1 = arith.constant 0 : i32
    return %c0_i32, %c0_i32_0 : i32, i32
  }
  func.func @transform_14(%arg0: i32) -> (i32, i32) {
    %c0_i32 = arith.constant 0 : i32
    %c0_i32_0 = arith.constant 0 : i32
    %c0_i32_1 = arith.constant 0 : i32
    return %c0_i32, %c0_i32_0 : i32, i32
  }
  func.func @transform_15(%arg0: i32) -> (i32, i32) {
    %c0_i32 = arith.constant 0 : i32
    %c0_i32_0 = arith.constant 0 : i32
    %c0_i32_1 = arith.constant 0 : i32
    return %c0_i32, %c0_i32_0 : i32, i32
  }
  func.func @transform_16(%arg0: i32) -> (i32, i32) {
    %c0_i32 = arith.constant 0 : i32
    %c0_i32_0 = arith.constant 0 : i32
    %c0_i32_1 = arith.constant 0 : i32
    return %c0_i32, %c0_i32_0 : i32, i32
  }
  func.func @transform_17(%arg0: i32) -> (i32, i32) {
    %c0_i32 = arith.constant 0 : i32
    %c0_i32_0 = arith.constant 0 : i32
    %c0_i32_1 = arith.constant 0 : i32
    return %c0_i32, %c0_i32_0 : i32, i32
  }
  func.func @transform_18(%arg0: i32) -> (i32, i32) {
    %c0_i32 = arith.constant 0 : i32
    %c0_i32_0 = arith.constant 0 : i32
    %c0_i32_1 = arith.constant 0 : i32
    return %c0_i32, %c0_i32_0 : i32, i32
  }
  func.func @transform_19(%arg0: i32) -> (i32, i32, i32) {
    %c0_i32 = arith.constant 0 : i32
    %c0_i32_0 = arith.constant 0 : i32
    %c0_i32_1 = arith.constant 0 : i32
    return %arg0, %c0_i32, %c0_i32_0 : i32, i32, i32
  }
  func.func @transform_20(%arg0: i32) -> (i32, i32, i32) {
    %c0_i32 = arith.constant 0 : i32
    %c0_i32_0 = arith.constant 0 : i32
    %c0_i32_1 = arith.constant 0 : i32
    return %arg0, %c0_i32, %c0_i32_0 : i32, i32, i32
  }
}

</mosaic_0001>

<llo_original>
// kernel: dino_forward.1
$region0: #{dino_forward.1}
  #allocation0 [shape = 'u32[]', space=smem, size = 0x4, offset = 0x4, fixed_abs, tag = 'smem constant byte address 0x4 - core index']
  #allocation1 [shape = 'u32[144,128]{1,0:T(1,128)}', space=vmem, size = 0x12000, scoped, tag = 'internal scratch']
  %s0 = inlined_call_operand.vmem [shape: bf16[32,192], index: 0, kind: input, shape index: {}]
  %s1 = inlined_call_operand.vmem [shape: f32[1,128], index: 1, kind: input, shape index: {}]
  %s2 = inlined_call_operand.vmem [shape: f32[16,128], index: 2, kind: input, shape index: {}]
  %s3 = inlined_call_operand.vmem [shape: bf16[192,128], index: 3, kind: input, shape index: {}]
  %s4 = inlined_call_operand.vmem [shape: f32[1,128], index: 4, kind: input, shape index: {}]
  %s5 = inlined_call_operand.vmem [shape: f32[1,128], index: 5, kind: input, shape index: {}]
  %s6 = inlined_call_operand.vmem [shape: f32[1,128], index: 6, kind: input, shape index: {}]
  %s7 = inlined_call_operand.vmem [shape: bf16[128,384], index: 7, kind: input, shape index: {}]
  %s8 = inlined_call_operand.vmem [shape: f32[1,384], index: 8, kind: input, shape index: {}]
  %s9 = inlined_call_operand.vmem [shape: bf16[128,128], index: 9, kind: input, shape index: {}]
  %s10 = inlined_call_operand.vmem [shape: f32[1,128], index: 10, kind: input, shape index: {}]
  %s11 = inlined_call_operand.vmem [shape: f32[1,128], index: 11, kind: input, shape index: {}]
  %s12 = inlined_call_operand.vmem [shape: f32[1,128], index: 12, kind: input, shape index: {}]
  %s13 = inlined_call_operand.vmem [shape: bf16[128,512], index: 13, kind: input, shape index: {}]
  %s14 = inlined_call_operand.vmem [shape: f32[1,512], index: 14, kind: input, shape index: {}]
  %s15 = inlined_call_operand.vmem [shape: bf16[512,128], index: 15, kind: input, shape index: {}]
  %s16 = inlined_call_operand.vmem [shape: f32[1,128], index: 16, kind: input, shape index: {}]
  %s17 = inlined_call_operand.vmem [shape: f32[1,128], index: 17, kind: input, shape index: {}]
  %s18 = inlined_call_operand.vmem [shape: f32[1,128], index: 18, kind: input, shape index: {}]
  %s19 = inlined_call_operand.hbm [shape: f32[2,1,128], index: 19, kind: output, shape index: {0}]
  %s20 = inlined_call_operand.hbm [shape: f32[2,16,128], index: 20, kind: output, shape index: {1}]
  %21 = xla_tuple %s19, %s20
  %s22 = sld [smem:[#allocation0]]
  $region117: #{dino_forward.1} parent=0
    _
  %s24 = ssub.s32 1, %s22
  %s25 = scalar_select 0, %s24, %s22
  $region1: #{dino_forward.1} parent=0
    #allocation2 [shape = 'u8[1024]{0}', space=vmem, size = 0x400, scoped, tag = 'output window, operand 0']
    #allocation3 [shape = 's32[2]{0}', space=sflag, size = 0x8, scoped, tag = 'scoped memory for dino_forward.1']
    #allocation4 [shape = 'u8[16384]{0}', space=vmem, size = 0x4000, scoped, tag = 'output window, operand 1']
    #allocation5 [shape = 's32[2]{0}', space=sflag, size = 0x8, scoped, tag = 'scoped memory for dino_forward.1']
    %26 = vsyncpa [#allocation3], 0
    %s27 = scalar_lea.sflag [#allocation3], 1
    %28 = vsyncpa %s27, 0
    %29 = vsyncpa [#allocation5], 0
    %s30 = scalar_lea.sflag [#allocation5], 1
    %31 = vsyncpa %s30, 0
    loop: start=0, step=1, limit=4
    $region2: #{dino_forward.1} parent=1 // loop_pre_header
      _
    $region3: #{dino_forward.1} parent=1 // loop_header
      %s33 = sphi 0, %s37
      %p34 = scmp.ge.s32.totalorder %s33, 4
      %s43 = sphi 0, %s45
      %s46 = sphi 0, %s43
      %s47 = sphi 0, %s46
      %s63 = sphi 0, %s47
      %s67 = sphi 0, %s67
      %s69 = sphi 0, %s67
      %s70 = sphi 0, %s69
      %s84 = sphi 0, %s70
      %s88 = sphi 0, %s88
      %s90 = sphi 0, %s88
      %s91 = sphi 0, %s90
      %s105 = sphi 0, %s91
      %s109 = sphi 0, %s109
      %s111 = sphi 0, %s109
      %s112 = sphi 0, %s111
      %s126 = sphi 0, %s112
      %s130 = sphi 0, %s130
      %s132 = sphi 0, %s130
      %s133 = sphi 0, %s132
      %s147 = sphi 0, %s133
      %s151 = sphi 0, %s151
      %s153 = sphi 0, %s151
      %s154 = sphi 0, %s153
      %s168 = sphi 0, %s154
      %s172 = sphi 0, %s172
      %s174 = sphi 0, %s172
      %s175 = sphi 0, %s174
      %s189 = sphi 0, %s175
      %s193 = sphi 0, %s193
      %s195 = sphi 0, %s193
      %s196 = sphi 0, %s195
      %s210 = sphi 0, %s196
      %s214 = sphi 0, %s214
      %s216 = sphi 0, %s214
      %s217 = sphi 0, %s216
      %s231 = sphi 0, %s217
      %s235 = sphi 0, %s235
      %s237 = sphi 0, %s235
      %s238 = sphi 0, %s237
      %s252 = sphi 0, %s238
      %s256 = sphi 0, %s256
      %s258 = sphi 0, %s256
      %s259 = sphi 0, %s258
      %s273 = sphi 0, %s259
      %s277 = sphi 0, %s277
      %s279 = sphi 0, %s277
      %s280 = sphi 0, %s279
      %s294 = sphi 0, %s280
      %s298 = sphi 0, %s298
      %s300 = sphi 0, %s298
      %s301 = sphi 0, %s300
      %s315 = sphi 0, %s301
      %s319 = sphi 0, %s319
      %s321 = sphi 0, %s319
      %s322 = sphi 0, %s321
      %s336 = sphi 0, %s322
      %s340 = sphi 0, %s340
      %s342 = sphi 0, %s340
      %s343 = sphi 0, %s342
      %s357 = sphi 0, %s343
      %s361 = sphi 0, %s361
      %s363 = sphi 0, %s361
      %s364 = sphi 0, %s363
      %s378 = sphi 0, %s364
      %s382 = sphi 0, %s382
      %s384 = sphi 0, %s382
      %s385 = sphi 0, %s384
      %s399 = sphi 0, %s385
      %s403 = sphi 0, %s403
      %s405 = sphi 0, %s403
      %s406 = sphi 0, %s405
      %s420 = sphi 0, %s406
      %s424 = sphi 0, %s424
      %s426 = sphi 0, %s424
      %s427 = sphi 0, %s426
      %s441 = sphi 0, %s427
      %s447 = sphi 0, %s449
      %s450 = sphi 0, %s447
      %s451 = sphi 0, %s450
      %s467 = sphi 0, %s451
      %s473 = sphi 0, %s475
      %s476 = sphi 0, %s473
      %s477 = sphi 0, %s476
      %s493 = sphi 0, %s477
    $region4: #{dino_forward.1} parent=1 // loop_header_branch
      %36 = sbr.rel (%p34) target = $region8
    $region5: #{dino_forward.1} parent=1 // loop_body
      %s38 = ssub.s32 %s33, 1
      %s39 = ssub.s32 %s33, 2
      %s40 = sadd.s32 %s33, 1
      %s41 = ssub.s32 %s33, %s40
      %p42 = scmp.eq.s32.totalorder %s41, 0
      %s44 = sadd.s32 %s43, 1
      %s45 = scalar_select %p42, %s43, %s44
      %p48 = pneg %p42
      %p49 = scmp.eq.s32.totalorder %s33, 1
      %p50 = por %p48, %p49
      %p51 = scmp.ne.s32.totalorder %s43, %s46
      %p52 = scmp.eq.s32.totalorder %s33, 0
      %p53 = por %p51, %p52
      %p54 = scmp.ne.s32.totalorder %s43, %s46
      %p55 = scmp.eq.s32.totalorder %s38, 1
      %p56 = por %p54, %p55
      %p57 = scmp.ne.s32.totalorder %s46, %s47
      %p58 = scmp.eq.s32.totalorder %s38, 0
      %p59 = por %p57, %p58
      %p60 = scmp.ne.s32.totalorder %s46, %s47
      %p61 = scmp.eq.s32.totalorder %s39, 1
      %p62 = por %p60, %p61
      %p64 = scmp.ne.s32.totalorder %s47, %s63
      %p65 = scmp.eq.s32.totalorder %s39, 0
      %p66 = por %p64, %p65
      %s68 = sadd.s32 %s67, 1
      %p71 = scmp.eq.s32.totalorder %s33, 1
      %p72 = scmp.ne.s32.totalorder %s67, %s69
      %p73 = scmp.eq.s32.totalorder %s33, 0
      %p74 = por %p72, %p73
      %p75 = scmp.ne.s32.totalorder %s67, %s69
      %p76 = scmp.eq.s32.totalorder %s38, 1
      %p77 = por %p75, %p76
      %p78 = scmp.ne.s32.totalorder %s69, %s70
      %p79 = scmp.eq.s32.totalorder %s38, 0
      %p80 = por %p78, %p79
      %p81 = scmp.ne.s32.totalorder %s69, %s70
      %p82 = scmp.eq.s32.totalorder %s39, 1
      %p83 = por %p81, %p82
      %p85 = scmp.ne.s32.totalorder %s70, %s84
      %p86 = scmp.eq.s32.totalorder %s39, 0
      %p87 = por %p85, %p86
      %s89 = sadd.s32 %s88, 1
      %p92 = scmp.eq.s32.totalorder %s33, 1
      %p93 = scmp.ne.s32.totalorder %s88, %s90
      %p94 = scmp.eq.s32.totalorder %s33, 0
      %p95 = por %p93, %p94
      %p96 = scmp.ne.s32.totalorder %s88, %s90
      %p97 = scmp.eq.s32.totalorder %s38, 1
      %p98 = por %p96, %p97
      %p99 = scmp.ne.s32.totalorder %s90, %s91
      %p100 = scmp.eq.s32.totalorder %s38, 0
      %p101 = por %p99, %p100
      %p102 = scmp.ne.s32.totalorder %s90, %s91
      %p103 = scmp.eq.s32.totalorder %s39, 1
      %p104 = por %p102, %p103
      %p106 = scmp.ne.s32.totalorder %s91, %s105
      %p107 = scmp.eq.s32.totalorder %s39, 0
      %p108 = por %p106, %p107
      %s110 = sadd.s32 %s109, 1
      %p113 = scmp.eq.s32.totalorder %s33, 1
      %p114 = scmp.ne.s32.totalorder %s109, %s111
      %p115 = scmp.eq.s32.totalorder %s33, 0
      %p116 = por %p114, %p115
      %p117 = scmp.ne.s32.totalorder %s109, %s111
      %p118 = scmp.eq.s32.totalorder %s38, 1
      %p119 = por %p117, %p118
      %p120 = scmp.ne.s32.totalorder %s111, %s112
      %p121 = scmp.eq.s32.totalorder %s38, 0
      %p122 = por %p120, %p121
      %p123 = scmp.ne.s32.totalorder %s111, %s112
      %p124 = scmp.eq.s32.totalorder %s39, 1
      %p125 = por %p123, %p124
      %p127 = scmp.ne.s32.totalorder %s112, %s126
      %p128 = scmp.eq.s32.totalorder %s39, 0
      %p129 = por %p127, %p128
      %s131 = sadd.s32 %s130, 1
      %p134 = scmp.eq.s32.totalorder %s33, 1
      %p135 = scmp.ne.s32.totalorder %s130, %s132
      %p136 = scmp.eq.s32.totalorder %s33, 0
      %p137 = por %p135, %p136
      %p138 = scmp.ne.s32.totalorder %s130, %s132
      %p139 = scmp.eq.s32.totalorder %s38, 1
      %p140 = por %p138, %p139
      %p141 = scmp.ne.s32.totalorder %s132, %s133
      %p142 = scmp.eq.s32.totalorder %s38, 0
      %p143 = por %p141, %p142
      %p144 = scmp.ne.s32.totalorder %s132, %s133
      %p145 = scmp.eq.s32.totalorder %s39, 1
      %p146 = por %p144, %p145
      %p148 = scmp.ne.s32.totalorder %s133, %s147
      %p149 = scmp.eq.s32.totalorder %s39, 0
      %p150 = por %p148, %p149
      %s152 = sadd.s32 %s151, 1
      %p155 = scmp.eq.s32.totalorder %s33, 1
      %p156 = scmp.ne.s32.totalorder %s151, %s153
      %p157 = scmp.eq.s32.totalorder %s33, 0
      %p158 = por %p156, %p157
      %p159 = scmp.ne.s32.totalorder %s151, %s153
      %p160 = scmp.eq.s32.totalorder %s38, 1
      %p161 = por %p159, %p160
      %p162 = scmp.ne.s32.totalorder %s153, %s154
      %p163 = scmp.eq.s32.totalorder %s38, 0
      %p164 = por %p162, %p163
      %p165 = scmp.ne.s32.totalorder %s153, %s154
      %p166 = scmp.eq.s32.totalorder %s39, 1
      %p167 = por %p165, %p166
      %p169 = scmp.ne.s32.totalorder %s154, %s168
      %p170 = scmp.eq.s32.totalorder %s39, 0
      %p171 = por %p169, %p170
      %s173 = sadd.s32 %s172, 1
      %p176 = scmp.eq.s32.totalorder %s33, 1
      %p177 = scmp.ne.s32.totalorder %s172, %s174
      %p178 = scmp.eq.s32.totalorder %s33, 0
      %p179 = por %p177, %p178
      %p180 = scmp.ne.s32.totalorder %s172, %s174
      %p181 = scmp.eq.s32.totalorder %s38, 1
      %p182 = por %p180, %p181
      %p183 = scmp.ne.s32.totalorder %s174, %s175
      %p184 = scmp.eq.s32.totalorder %s38, 0
      %p185 = por %p183, %p184
      %p186 = scmp.ne.s32.totalorder %s174, %s175
      %p187 = scmp.eq.s32.totalorder %s39, 1
      %p188 = por %p186, %p187
      %p190 = scmp.ne.s32.totalorder %s175, %s189
      %p191 = scmp.eq.s32.totalorder %s39, 0
      %p192 = por %p190, %p191
      %s194 = sadd.s32 %s193, 1
      %p197 = scmp.eq.s32.totalorder %s33, 1
      %p198 = scmp.ne.s32.totalorder %s193, %s195
      %p199 = scmp.eq.s32.totalorder %s33, 0
      %p200 = por %p198, %p199
      %p201 = scmp.ne.s32.totalorder %s193, %s195
      %p202 = scmp.eq.s32.totalorder %s38, 1
      %p203 = por %p201, %p202
      %p204 = scmp.ne.s32.totalorder %s195, %s196
      %p205 = scmp.eq.s32.totalorder %s38, 0
      %p206 = por %p204, %p205
      %p207 = scmp.ne.s32.totalorder %s195, %s196
      %p208 = scmp.eq.s32.totalorder %s39, 1
      %p209 = por %p207, %p208
      %p211 = scmp.ne.s32.totalorder %s196, %s210
      %p212 = scmp.eq.s32.totalorder %s39, 0
      %p213 = por %p211, %p212
      %s215 = sadd.s32 %s214, 1
      %p218 = scmp.eq.s32.totalorder %s33, 1
      %p219 = scmp.ne.s32.totalorder %s214, %s216
      %p220 = scmp.eq.s32.totalorder %s33, 0
      %p221 = por %p219, %p220
      %p222 = scmp.ne.s32.totalorder %s214, %s216
      %p223 = scmp.eq.s32.totalorder %s38, 1
      %p224 = por %p222, %p223
      %p225 = scmp.ne.s32.totalorder %s216, %s217
      %p226 = scmp.eq.s32.totalorder %s38, 0
      %p227 = por %p225, %p226
      %p228 = scmp.ne.s32.totalorder %s216, %s217
      %p229 = scmp.eq.s32.totalorder %s39, 1
      %p230 = por %p228, %p229
      %p232 = scmp.ne.s32.totalorder %s217, %s231
      %p233 = scmp.eq.s32.totalorder %s39, 0
      %p234 = por %p232, %p233
      %s236 = sadd.s32 %s235, 1
      %p239 = scmp.eq.s32.totalorder %s33, 1
      %p240 = scmp.ne.s32.totalorder %s235, %s237
      %p241 = scmp.eq.s32.totalorder %s33, 0
      %p242 = por %p240, %p241
      %p243 = scmp.ne.s32.totalorder %s235, %s237
      %p244 = scmp.eq.s32.totalorder %s38, 1
      %p245 = por %p243, %p244
      %p246 = scmp.ne.s32.totalorder %s237, %s238
      %p247 = scmp.eq.s32.totalorder %s38, 0
      %p248 = por %p246, %p247
      %p249 = scmp.ne.s32.totalorder %s237, %s238
      %p250 = scmp.eq.s32.totalorder %s39, 1
      %p251 = por %p249, %p250
      %p253 = scmp.ne.s32.totalorder %s238, %s252
      %p254 = scmp.eq.s32.totalorder %s39, 0
      %p255 = por %p253, %p254
      %s257 = sadd.s32 %s256, 1
      %p260 = scmp.eq.s32.totalorder %s33, 1
      %p261 = scmp.ne.s32.totalorder %s256, %s258
      %p262 = scmp.eq.s32.totalorder %s33, 0
      %p263 = por %p261, %p262
      %p264 = scmp.ne.s32.totalorder %s256, %s258
      %p265 = scmp.eq.s32.totalorder %s38, 1
      %p266 = por %p264, %p265
      %p267 = scmp.ne.s32.totalorder %s258, %s259
      %p268 = scmp.eq.s32.totalorder %s38, 0
      %p269 = por %p267, %p268
      %p270 = scmp.ne.s32.totalorder %s258, %s259
      %p271 = scmp.eq.s32.totalorder %s39, 1
      %p272 = por %p270, %p271
      %p274 = scmp.ne.s32.totalorder %s259, %s273
      %p275 = scmp.eq.s32.totalorder %s39, 0
      %p276 = por %p274, %p275
      %s278 = sadd.s32 %s277, 1
      %p281 = scmp.eq.s32.totalorder %s33, 1
      %p282 = scmp.ne.s32.totalorder %s277, %s279
      %p283 = scmp.eq.s32.totalorder %s33, 0
      %p284 = por %p282, %p283
      %p285 = scmp.ne.s32.totalorder %s277, %s279
      %p286 = scmp.eq.s32.totalorder %s38, 1
      %p287 = por %p285, %p286
      %p288 = scmp.ne.s32.totalorder %s279, %s280
      %p289 = scmp.eq.s32.totalorder %s38, 0
      %p290 = por %p288, %p289
      %p291 = scmp.ne.s32.totalorder %s279, %s280
      %p292 = scmp.eq.s32.totalorder %s39, 1
      %p293 = por %p291, %p292
      %p295 = scmp.ne.s32.totalorder %s280, %s294
      %p296 = scmp.eq.s32.totalorder %s39, 0
      %p297 = por %p295, %p296
      %s299 = sadd.s32 %s298, 1
      %p302 = scmp.eq.s32.totalorder %s33, 1
      %p303 = scmp.ne.s32.totalorder %s298, %s300
      %p304 = scmp.eq.s32.totalorder %s33, 0
      %p305 = por %p303, %p304
      %p306 = scmp.ne.s32.totalorder %s298, %s300
      %p307 = scmp.eq.s32.totalorder %s38, 1
      %p308 = por %p306, %p307
      %p309 = scmp.ne.s32.totalorder %s300, %s301
      %p310 = scmp.eq.s32.totalorder %s38, 0
      %p311 = por %p309, %p310
      %p312 = scmp.ne.s32.totalorder %s300, %s301
      %p313 = scmp.eq.s32.totalorder %s39, 1
      %p314 = por %p312, %p313
      %p316 = scmp.ne.s32.totalorder %s301, %s315
      %p317 = scmp.eq.s32.totalorder %s39, 0
      %p318 = por %p316, %p317
      %s320 = sadd.s32 %s319, 1
      %p323 = scmp.eq.s32.totalorder %s33, 1
      %p324 = scmp.ne.s32.totalorder %s319, %s321
      %p325 = scmp.eq.s32.totalorder %s33, 0
      %p326 = por %p324, %p325
      %p327 = scmp.ne.s32.totalorder %s319, %s321
      %p328 = scmp.eq.s32.totalorder %s38, 1
      %p329 = por %p327, %p328
      %p330 = scmp.ne.s32.totalorder %s321, %s322
      %p331 = scmp.eq.s32.totalorder %s38, 0
      %p332 = por %p330, %p331
      %p333 = scmp.ne.s32.totalorder %s321, %s322
      %p334 = scmp.eq.s32.totalorder %s39, 1
      %p335 = por %p333, %p334
      %p337 = scmp.ne.s32.totalorder %s322, %s336
      %p338 = scmp.eq.s32.totalorder %s39, 0
      %p339 = por %p337, %p338
      %s341 = sadd.s32 %s340, 1
      %p344 = scmp.eq.s32.totalorder %s33, 1
      %p345 = scmp.ne.s32.totalorder %s340, %s342
      %p346 = scmp.eq.s32.totalorder %s33, 0
      %p347 = por %p345, %p346
      %p348 = scmp.ne.s32.totalorder %s340, %s342
      %p349 = scmp.eq.s32.totalorder %s38, 1
      %p350 = por %p348, %p349
      %p351 = scmp.ne.s32.totalorder %s342, %s343
      %p352 = scmp.eq.s32.totalorder %s38, 0
      %p353 = por %p351, %p352
      %p354 = scmp.ne.s32.totalorder %s342, %s343
      %p355 = scmp.eq.s32.totalorder %s39, 1
      %p356 = por %p354, %p355
      %p358 = scmp.ne.s32.totalorder %s343, %s357
      %p359 = scmp.eq.s32.totalorder %s39, 0
      %p360 = por %p358, %p359
      %s362 = sadd.s32 %s361, 1
      %p365 = scmp.eq.s32.totalorder %s33, 1
      %p366 = scmp.ne.s32.totalorder %s361, %s363
      %p367 = scmp.eq.s32.totalorder %s33, 0
      %p368 = por %p366, %p367
      %p369 = scmp.ne.s32.totalorder %s361, %s363
      %p370 = scmp.eq.s32.totalorder %s38, 1
      %p371 = por %p369, %p370
      %p372 = scmp.ne.s32.totalorder %s363, %s364
      %p373 = scmp.eq.s32.totalorder %s38, 0
      %p374 = por %p372, %p373
      %p375 = scmp.ne.s32.totalorder %s363, %s364
      %p376 = scmp.eq.s32.totalorder %s39, 1
      %p377 = por %p375, %p376
      %p379 = scmp.ne.s32.totalorder %s364, %s378
      %p380 = scmp.eq.s32.totalorder %s39, 0
      %p381 = por %p379, %p380
      %s383 = sadd.s32 %s382, 1
      %p386 = scmp.eq.s32.totalorder %s33, 1
      %p387 = scmp.ne.s32.totalorder %s382, %s384
      %p388 = scmp.eq.s32.totalorder %s33, 0
      %p389 = por %p387, %p388
      %p390 = scmp.ne.s32.totalorder %s382, %s384
      %p391 = scmp.eq.s32.totalorder %s38, 1
      %p392 = por %p390, %p391
      %p393 = scmp.ne.s32.totalorder %s384, %s385
      %p394 = scmp.eq.s32.totalorder %s38, 0
      %p395 = por %p393, %p394
      %p396 = scmp.ne.s32.totalorder %s384, %s385
      %p397 = scmp.eq.s32.totalorder %s39, 1
      %p398 = por %p396, %p397
      %p400 = scmp.ne.s32.totalorder %s385, %s399
      %p401 = scmp.eq.s32.totalorder %s39, 0
      %p402 = por %p400, %p401
      %s404 = sadd.s32 %s403, 1
      %p407 = scmp.eq.s32.totalorder %s33, 1
      %p408 = scmp.ne.s32.totalorder %s403, %s405
      %p409 = scmp.eq.s32.totalorder %s33, 0
      %p410 = por %p408, %p409
      %p411 = scmp.ne.s32.totalorder %s403, %s405
      %p412 = scmp.eq.s32.totalorder %s38, 1
      %p413 = por %p411, %p412
      %p414 = scmp.ne.s32.totalorder %s405, %s406
      %p415 = scmp.eq.s32.totalorder %s38, 0
      %p416 = por %p414, %p415
      %p417 = scmp.ne.s32.totalorder %s405, %s406
      %p418 = scmp.eq.s32.totalorder %s39, 1
      %p419 = por %p417, %p418
      %p421 = scmp.ne.s32.totalorder %s406, %s420
      %p422 = scmp.eq.s32.totalorder %s39, 0
      %p423 = por %p421, %p422
      %s425 = sadd.s32 %s424, 1
      %p428 = scmp.eq.s32.totalorder %s33, 1
      %p429 = scmp.ne.s32.totalorder %s424, %s426
      %p430 = scmp.eq.s32.totalorder %s33, 0
      %p431 = por %p429, %p430
      %p432 = scmp.ne.s32.totalorder %s424, %s426
      %p433 = scmp.eq.s32.totalorder %s38, 1
      %p434 = por %p432, %p433
      %p435 = scmp.ne.s32.totalorder %s426, %s427
      %p436 = scmp.eq.s32.totalorder %s38, 0
      %p437 = por %p435, %p436
      %p438 = scmp.ne.s32.totalorder %s426, %s427
      %p439 = scmp.eq.s32.totalorder %s39, 1
      %p440 = por %p438, %p439
      %p442 = scmp.ne.s32.totalorder %s427, %s441
      %p443 = scmp.eq.s32.totalorder %s39, 0
      %p444 = por %p442, %p443
      %s445 = ssub.s32 %s33, %s40
      %p446 = scmp.eq.s32.totalorder %s445, 0
      %s448 = sadd.s32 %s447, 1
      %s449 = scalar_select %p446, %s447, %s448
      %p452 = pneg %p446
      %p453 = scmp.eq.s32.totalorder %s33, 1
      %p454 = por %p452, %p453
      %p455 = scmp.ne.s32.totalorder %s447, %s450
      %p456 = scmp.eq.s32.totalorder %s33, 0
      %p457 = por %p455, %p456
      %p458 = scmp.ne.s32.totalorder %s447, %s450
      %p459 = scmp.eq.s32.totalorder %s38, 1
      %p460 = por %p458, %p459
      %p461 = scmp.ne.s32.totalorder %s450, %s451
      %p462 = scmp.eq.s32.totalorder %s38, 0
      %p463 = por %p461, %p462
      %p464 = scmp.ne.s32.totalorder %s450, %s451
      %p465 = scmp.eq.s32.totalorder %s39, 1
      %p466 = por %p464, %p465
      %p468 = scmp.ne.s32.totalorder %s451, %s467
      %p469 = scmp.eq.s32.totalorder %s39, 0
      %p470 = por %p468, %p469
      %s471 = ssub.s32 %s33, %s40
      %p472 = scmp.eq.s32.totalorder %s471, 0
      %s474 = sadd.s32 %s473, 1
      %s475 = scalar_select %p472, %s473, %s474
      %p478 = pneg %p472
      %p479 = scmp.eq.s32.totalorder %s33, 1
      %p480 = por %p478, %p479
      %p481 = scmp.ne.s32.totalorder %s473, %s476
      %p482 = scmp.eq.s32.totalorder %s33, 0
      %p483 = por %p481, %p482
      %p484 = scmp.ne.s32.totalorder %s473, %s476
      %p485 = scmp.eq.s32.totalorder %s38, 1
      %p486 = por %p484, %p485
      %p487 = scmp.ne.s32.totalorder %s476, %s477
      %p488 = scmp.eq.s32.totalorder %s38, 0
      %p489 = por %p487, %p488
      %p490 = scmp.ne.s32.totalorder %s476, %s477
      %p491 = scmp.eq.s32.totalorder %s39, 1
      %p492 = por %p490, %p491
      %p494 = scmp.ne.s32.totalorder %s477, %s493
      %p495 = scmp.eq.s32.totalorder %s39, 0
      %p496 = por %p494, %p495
      %p497 = scmp.le.s32.totalorder 1, %s33
      %p498 = scmp.lt.s32.totalorder %s33, 3
      %p499 = pnand %p497, %p498
      %p500 = pneg %p499
      // Predicated region
      $region9: #{dino_forward.1} parent=5 // pred_check
        _
      $region10: #{dino_forward.1} parent=5 // pred_check_branch
        %502 = sbr.rel (%p499) target = $region12
      $region11: #{dino_forward.1} parent=5 // pred_region
        %s503 = ssub.s32 %s33, 1
        // Predicated region
        $region13: #{dino_forward.1} parent=11 // pred_check
          %p504 = pneg %p80
        $region14: #{dino_forward.1} parent=11 // pred_check_branch
          %506 = sbr.rel (%p504) target = $region16
        $region15: #{dino_forward.1} parent=11 // pred_region
          _
        $region16: #{dino_forward.1} parent=11 // pred_fallthru
          _
        // Predicated region
        $region17: #{dino_forward.1} parent=11 // pred_check
          %p507 = pneg %p101
        $region18: #{dino_forward.1} parent=11 // pred_check_branch
          %509 = sbr.rel (%p507) target = $region20
        $region19: #{dino_forward.1} parent=11 // pred_region
          _
        $region20: #{dino_forward.1} parent=11 // pred_fallthru
          _
        // Predicated region
        $region21: #{dino_forward.1} parent=11 // pred_check
          %p510 = pneg %p122
        $region22: #{dino_forward.1} parent=11 // pred_check_branch
          %512 = sbr.rel (%p510) target = $region24
        $region23: #{dino_forward.1} parent=11 // pred_region
          _
        $region24: #{dino_forward.1} parent=11 // pred_fallthru
          _
        // Predicated region
        $region25: #{dino_forward.1} parent=11 // pred_check
          %p513 = pneg %p143
        $region26: #{dino_forward.1} parent=11 // pred_check_branch
          %515 = sbr.rel (%p513) target = $region28
        $region27: #{dino_forward.1} parent=11 // pred_region
          _
        $region28: #{dino_forward.1} parent=11 // pred_fallthru
          _
        // Predicated region
        $region29: #{dino_forward.1} parent=11 // pred_check
          %p516 = pneg %p164
        $region30: #{dino_forward.1} parent=11 // pred_check_branch
          %518 = sbr.rel (%p516) target = $region32
        $region31: #{dino_forward.1} parent=11 // pred_region
          _
        $region32: #{dino_forward.1} parent=11 // pred_fallthru
          _
        // Predicated region
        $region33: #{dino_forward.1} parent=11 // pred_check
          %p519 = pneg %p185
        $region34: #{dino_forward.1} parent=11 // pred_check_branch
          %521 = sbr.rel (%p519) target = $region36
        $region35: #{dino_forward.1} parent=11 // pred_region
          _
        $region36: #{dino_forward.1} parent=11 // pred_fallthru
          _
        // Predicated region
        $region37: #{dino_forward.1} parent=11 // pred_check
          %p522 = pneg %p206
        $region38: #{dino_forward.1} parent=11 // pred_check_branch
          %524 = sbr.rel (%p522) target = $region40
        $region39: #{dino_forward.1} parent=11 // pred_region
          _
        $region40: #{dino_forward.1} parent=11 // pred_fallthru
          _
        // Predicated region
        $region41: #{dino_forward.1} parent=11 // pred_check
          %p525 = pneg %p227
        $region42: #{dino_forward.1} parent=11 // pred_check_branch
          %527 = sbr.rel (%p525) target = $region44
        $region43: #{dino_forward.1} parent=11 // pred_region
          _
        $region44: #{dino_forward.1} parent=11 // pred_fallthru
          _
        // Predicated region
        $region45: #{dino_forward.1} parent=11 // pred_check
          %p528 = pneg %p248
        $region46: #{dino_forward.1} parent=11 // pred_check_branch
          %530 = sbr.rel (%p528) target = $region48
        $region47: #{dino_forward.1} parent=11 // pred_region
          _
        $region48: #{dino_forward.1} parent=11 // pred_fallthru
          _
        // Predicated region
        $region49: #{dino_forward.1} parent=11 // pred_check
          %p531 = pneg %p269
        $region50: #{dino_forward.1} parent=11 // pred_check_branch
          %533 = sbr.rel (%p531) target = $region52
        $region51: #{dino_forward.1} parent=11 // pred_region
          _
        $region52: #{dino_forward.1} parent=11 // pred_fallthru
          _
        // Predicated region
        $region53: #{dino_forward.1} parent=11 // pred_check
          %p534 = pneg %p290
        $region54: #{dino_forward.1} parent=11 // pred_check_branch
          %536 = sbr.rel (%p534) target = $region56
        $region55: #{dino_forward.1} parent=11 // pred_region
          _
        $region56: #{dino_forward.1} parent=11 // pred_fallthru
          _
        // Predicated region
        $region57: #{dino_forward.1} parent=11 // pred_check
          %p537 = pneg %p311
        $region58: #{dino_forward.1} parent=11 // pred_check_branch
          %539 = sbr.rel (%p537) target = $region60
        $region59: #{dino_forward.1} parent=11 // pred_region
          _
        $region60: #{dino_forward.1} parent=11 // pred_fallthru
          _
        // Predicated region
        $region61: #{dino_forward.1} parent=11 // pred_check
          %p540 = pneg %p332
        $region62: #{dino_forward.1} parent=11 // pred_check_branch
          %542 = sbr.rel (%p540) target = $region64
        $region63: #{dino_forward.1} parent=11 // pred_region
          _
        $region64: #{dino_forward.1} parent=11 // pred_fallthru
          _
        // Predicated region
        $region65: #{dino_forward.1} parent=11 // pred_check
          %p543 = pneg %p353
        $region66: #{dino_forward.1} parent=11 // pred_check_branch
          %545 = sbr.rel (%p543) target = $region68
        $region67: #{dino_forward.1} parent=11 // pred_region
          _
        $region68: #{dino_forward.1} parent=11 // pred_fallthru
          _
        // Predicated region
        $region69: #{dino_forward.1} parent=11 // pred_check
          %p546 = pneg %p374
        $region70: #{dino_forward.1} parent=11 // pred_check_branch
          %548 = sbr.rel (%p546) target = $region72
        $region71: #{dino_forward.1} parent=11 // pred_region
          _
        $region72: #{dino_forward.1} parent=11 // pred_fallthru
          _
        // Predicated region
        $region73: #{dino_forward.1} parent=11 // pred_check
          %p549 = pneg %p395
        $region74: #{dino_forward.1} parent=11 // pred_check_branch
          %551 = sbr.rel (%p549) target = $region76
        $region75: #{dino_forward.1} parent=11 // pred_region
          _
        $region76: #{dino_forward.1} parent=11 // pred_fallthru
          _
        // Predicated region
        $region77: #{dino_forward.1} parent=11 // pred_check
          %p552 = pneg %p416
        $region78: #{dino_forward.1} parent=11 // pred_check_branch
          %554 = sbr.rel (%p552) target = $region80
        $region79: #{dino_forward.1} parent=11 // pred_region
          _
        $region80: #{dino_forward.1} parent=11 // pred_fallthru
          _
        // Predicated region
        $region81: #{dino_forward.1} parent=11 // pred_check
          %p555 = pneg %p437
        $region82: #{dino_forward.1} parent=11 // pred_check_branch
          %557 = sbr.rel (%p555) target = $region84
        $region83: #{dino_forward.1} parent=11 // pred_region
          _
        $region84: #{dino_forward.1} parent=11 // pred_fallthru
          _
      $region12: #{dino_forward.1} parent=5 // pred_fallthru
        _
      %p558 = scmp.lt.s32.totalorder %s33, 2
      // Predicated region
      $region85: #{dino_forward.1} parent=5 // pred_check
        %p559 = pneg %p558
      $region86: #{dino_forward.1} parent=5 // pred_check_branch
        %561 = sbr.rel (%p559) target = $region88
      $region87: #{dino_forward.1} parent=5 // pred_region
        // Predicated region
        $region89: #{dino_forward.1} parent=87 // pred_check
          %p562 = pneg %p53
        $region90: #{dino_forward.1} parent=87 // pred_check_branch
          %564 = sbr.rel (%p562) target = $region92
        $region91: #{dino_forward.1} parent=87 // pred_region
          %s565 = smul.u32 2, %s33
          %p566 = scmp.lt.s32.totalorder %s565, 3
          %s567 = scalar_select %p566, %s565, 3
          %s568 = smul.addr %s567, 2
          %s569 = smul.addr %s568, 4
          %s570 = scalar_lea.vmem %s0, %s569
          %s571 = smul.u32 2, %s33
        $region92: #{dino_forward.1} parent=87 // pred_fallthru
          _
      $region88: #{dino_forward.1} parent=5 // pred_fallthru
        _
      %p572 = scmp.le.s32.totalorder 1, %s33
      %p573 = scmp.lt.s32.totalorder %s33, 3
      %p574 = pnand %p572, %p573
      %p575 = pneg %p574
      // Predicated region
      $region93: #{dino_forward.1} parent=5 // pred_check
        _
      $region94: #{dino_forward.1} parent=5 // pred_check_branch
        %577 = sbr.rel (%p574) target = $region96
      $region95: #{dino_forward.1} parent=5 // pred_region
        %s578 = ssub.s32 %s33, 1
        %s579 = smul.u32 2, %s38
        %p580 = scmp.lt.s32.totalorder %s579, 3
        %s581 = scalar_select %p580, %s579, 3
        %s582 = smul.addr %s581, 2
        %s583 = smul.addr %s582, 4
        %s584 = scalar_lea.vmem %s0, %s583
        %p585 = pneg %p59
        %p586 = pneg %p56
        %p587 = pneg %p80
        %p588 = pneg %p77
        %p589 = pneg %p101
        %p590 = pneg %p98
        %p591 = pneg %p122
        %p592 = pneg %p119
        %p593 = pneg %p143
        %p594 = pneg %p140
        %p595 = pneg %p164
        %p596 = pneg %p161
        %p597 = pneg %p185
        %p598 = pneg %p182
        %p599 = pneg %p206
        %p600 = pneg %p203
        %p601 = pneg %p227
        %p602 = pneg %p224
        %p603 = pneg %p248
        %p604 = pneg %p245
        %p605 = pneg %p269
        %p606 = pneg %p266
        %p607 = pneg %p290
        %p608 = pneg %p287
        %p609 = pneg %p311
        %p610 = pneg %p308
        %p611 = pneg %p332
        %p612 = pneg %p329
        %p613 = pneg %p353
        %p614 = pneg %p350
        %p615 = pneg %p374
        %p616 = pneg %p371
        %p617 = pneg %p395
        %p618 = pneg %p392
        %p619 = pneg %p416
        %p620 = pneg %p413
        %p621 = pneg %p437
        %p622 = pneg %p434
        %p623 = pneg %p463
        %p624 = pneg %p460
        %s625 = sand.u32 %s450, 1
        %s626 = scalar_lea.sflag [#allocation3], %s625
        %s627 = sand.u32 %s450, 1
        %s628 = scalar_lea.vmem [#allocation2], %s627
        %p629 = pneg %p489
        %p630 = pneg %p486
        %s631 = sand.u32 %s476, 1
        %s632 = scalar_lea.sflag [#allocation5], %s631
        %s633 = sand.u32 %s476, 1
        %s634 = smul.addr %s633, 16
        %s635 = scalar_lea.vmem [#allocation4], %s634
        %s636 = smul.u32 2, %s38
        %p637 = scmp.lt.s32.totalorder %s636, 3
        %s638 = scalar_select %p637, %s636, 3
        %s639 = smul.addr %s638, 2
        %s640 = smul.addr %s639, 4
        %s641 = scalar_lea.vmem %s0, %s640
        %s642 = smul.u32 2, %s38
        %v644 = vld [vmem:[%s641] sm:$0xff]
        %v645 = vld [vmem:[%s641 + $0x8] sm:$0xff]
        %v646 = vld [vmem:[%s3] sm:$0xf]
        %v647 = vld [vmem:[%s3 + $0x4] sm:$0xf]
        %v648 = vld [vmem:[%s3 + $0x8] sm:$0xf]
        %v649 = vld [vmem:[%s3 + $0xc] sm:$0xf]
        %v650 = vld [vmem:[%s3 + $0x10] sm:$0xf]
        %v651 = vld [vmem:[%s3 + $0x14] sm:$0xf]
        %v652 = vld [vmem:[%s3 + $0x18] sm:$0xf]
        %v653 = vld [vmem:[%s3 + $0x1c] sm:$0xf]
        %v654 = vld [vmem:[%s3 + $0x20] sm:$0xf]
        %v655 = vld [vmem:[%s3 + $0x24] sm:$0xf]
        %v656 = vld [vmem:[%s3 + $0x28] sm:$0xf]
        %v657 = vld [vmem:[%s3 + $0x2c] sm:$0xf]
        %v658 = vld [vmem:[%s3 + $0x30] sm:$0xf]
        %v659 = vld [vmem:[%s3 + $0x34] sm:$0xf]
        %v660 = vld [vmem:[%s3 + $0x38] sm:$0xf]
        %v661 = vld [vmem:[%s3 + $0x3c] sm:$0xf]
        %v662 = vld [vmem:[%s3 + $0x40] sm:$0xf]
        %v663 = vld [vmem:[%s3 + $0x44] sm:$0xf]
        %v664 = vld [vmem:[%s3 + $0x48] sm:$0xf]
        %v665 = vld [vmem:[%s3 + $0x4c] sm:$0xf]
        %v666 = vld [vmem:[%s3 + $0x50] sm:$0xf]
        %v667 = vld [vmem:[%s3 + $0x54] sm:$0xf]
        %v668 = vld [vmem:[%s3 + $0x58] sm:$0xf]
        %v669 = vld [vmem:[%s3 + $0x5c] sm:$0xf]
        %v670 = vld [vmem:[%s4] sm:$0x1]
        %v672 = vlaneseq
        %v673 = vshrl.u32 %v672, 7
        %v674 = vsub.s32 0, %v673
        %v675 = vrot.slane %v670, %v674
        %v679 = vunpack.c.l.b16 %v644
        %v680 = vunpack.c.h.b16 %v644
        %v681 = vunpack.c.l.b16 %v645
        %v682 = vunpack.c.h.b16 %v645
        %v683 = vpack.c.b16 %v681, %v679
        %v684 = vpack.c.b16 %v682, %v680
        %v710 = vunpack.c.l.b16 %v646
        %v711 = vunpack.c.l.b16 %v647
        %v712 = vunpack.c.l.b16 %v648
        %v713 = vunpack.c.l.b16 %v649
        %v714 = vunpack.c.l.b16 %v650
        %v715 = vunpack.c.l.b16 %v651
        %v716 = vunpack.c.l.b16 %v652
        %v717 = vunpack.c.l.b16 %v653
        %v718 = vunpack.c.l.b16 %v654
        %v719 = vunpack.c.l.b16 %v655
        %v720 = vunpack.c.l.b16 %v656
        %v721 = vunpack.c.l.b16 %v657
        %v722 = vunpack.c.l.b16 %v658
        %v723 = vunpack.c.l.b16 %v659
        %v724 = vunpack.c.l.b16 %v660
        %v725 = vunpack.c.l.b16 %v661
        %v726 = vunpack.c.l.b16 %v662
        %v727 = vunpack.c.l.b16 %v663
        %v728 = vunpack.c.l.b16 %v664
        %v729 = vunpack.c.l.b16 %v665
        %v730 = vunpack.c.l.b16 %v666
        %v731 = vunpack.c.l.b16 %v667
        %v732 = vunpack.c.l.b16 %v668
        %v733 = vunpack.c.l.b16 %v669
        %v734 = vpack.c.b16 %v711, %v710
        %v735 = vpack.c.b16 %v713, %v712
        %v736 = vpack.c.b16 %v715, %v714
        %v737 = vpack.c.b16 %v717, %v716
        %v738 = vpack.c.b16 %v719, %v718
        %v739 = vpack.c.b16 %v721, %v720
        %v740 = vpack.c.b16 %v723, %v722
        %v741 = vpack.c.b16 %v725, %v724
        %v742 = vpack.c.b16 %v727, %v726
        %v743 = vpack.c.b16 %v729, %v728
        %v744 = vpack.c.b16 %v731, %v730
        %v745 = vpack.c.b16 %v733, %v732
        %vm758 = vcmask 523264
        %v760 = vsel %vm758, %v684, 0
        %762 = vmatprep.subr.bf16.mxu0 0
        %763 = vmatpush1.bf16.msra.mxu0 %v741
        %764 = vmatprep.subr.bf16.mxu0 0
        %765 = vmatpush1.bf16.msra.mxu0 %v740
        %766 = vmatprep.subr.bf16.mxu0 0
        %767 = vmatpush1.bf16.msra.mxu0 %v739
        %768 = vmatprep.subr.bf16.mxu0 0
        %769 = vmatpush1.bf16.msra.mxu0 %v738
        %770 = vmatprep.subr.bf16.mxu0 0
        %771 = vmatpush1.bf16.msra.mxu0 %v737
        %772 = vmatprep.subr.bf16.mxu0 0
        %773 = vmatpush1.bf16.msra.mxu0 %v736
        %774 = vmatprep.subr.bf16.mxu0 0
        %775 = vmatpush1.bf16.msra.mxu0 %v735
        %776 = vmatprep.subr.bf16.mxu0 0
        %777 = vmatpush1.bf16.msra.mxu0 %v734
        %778 = vmatprep.subr.bf16.mxu0 0
        %779 = vmatpush2.bf16.msra.mxu0 0
        %780 = vmatprep.subr.bf16.mxu0 0
        %781 = vmatpush2.bf16.msra.mxu0 0
        %782 = vmatprep.subr.bf16.mxu0 0
        %783 = vmatpush2.bf16.msra.mxu0 0
        %784 = vmatprep.subr.bf16.mxu0 0
        %785 = vmatpush2.bf16.msra.mxu0 0
        %786 = vmatprep.subr.bf16.mxu0 0
        %787 = vmatpush2.bf16.msra.mxu0 %v745
        %788 = vmatprep.subr.bf16.mxu0 0
        %789 = vmatpush2.bf16.msra.mxu0 %v744
        %790 = vmatprep.subr.bf16.mxu0 0
        %791 = vmatpush2.bf16.msra.mxu0 %v743
        %792 = vmatprep.subr.bf16.mxu0 0
        %793 = vmatpush2.bf16.msra.mxu0 %v742
        %794 = vmatprep.mubr.bf16.mxu0 %v760
        %795 = vmatmul.mubr.bf16.gmra.mxu0 %v683
        %v796 = vpop.f32.mrf.mxu0
        %v797 = vadd.f32 %v675, %v796
        %v798 = vpop.f32.mrf.mxu0
        %v799 = vpop.f32.mrf.mxu0
        %v800 = vadd.f32 %v675, %v799
        %v801 = vpop.f32.mrf.mxu0
        %802 = vdwg.mxu0
        %v803 = vld [vmem:[%s2] sm:$0xff]
        %v804 = vld [vmem:[%s2 + $0x8] sm:$0xff]
        %v805 = vadd.f32 %v797, %v803
        %v806 = vadd.f32 %v800, %v804
        %v807 = vld [vmem:[%s1] sm:$0x1]
        %vm810 = vcmask 1040384
        %v811 = vrot.slane %v805, 7
        %v812 = vrot.slane %v806, 7
        %v813 = vsel %vm810, %v811, %v812
        %v817 = vsel %vm810, %v807, %v811
        %v818 = vld [vmem:[%s5] sm:$0x1]
        %v819 = vld [vmem:[%s6] sm:$0x1]
        %820 = vadd.xlane.f32.xlu0 %v817
        %v821 = vpop.xlane.xlu0 %820
        %822 = vadd.xlane.f32.xlu0 %v813
        %v823 = vpop.xlane.xlu0 %822
        %v824 = vsel %vm810, %v812, 0.0
        %825 = vadd.xlane.f32.xlu0 %v824
        %v826 = vpop.xlane.xlu0 %825
        %v827 = vrcp.pop 128.0
        %v828 = vmul.f32 %v821, %v827
        %v829 = vmul.f32 %v823, %v827
        %v830 = vmul.f32 %v826, %v827
        %v831 = vsub.f32 %v817, %v828
        %v832 = vsub.f32 %v813, %v829
        %v833 = vsub.f32 %v812, %v830
        %v834 = vmul.f32 %v831, %v831
        %v835 = vmul.f32 %v832, %v832
        %v836 = vmul.f32 %v833, %v833
        %837 = vadd.xlane.f32.xlu0 %v834
        %v838 = vpop.xlane.xlu0 %837
        %839 = vadd.xlane.f32.xlu0 %v835
        %v840 = vpop.xlane.xlu0 %839
        %v841 = vsel %vm810, %v836, 0.0
        %842 = vadd.xlane.f32.xlu0 %v841
        %v843 = vpop.xlane.xlu0 %842
        %v844 = vmul.f32 %v838, %v827
        %v845 = vmul.f32 %v840, %v827
        %v846 = vmul.f32 %v843, %v827
        %v847 = vadd.f32 %v844, 1e-06
        %v848 = vadd.f32 %v845, 1e-06
        %v849 = vadd.f32 %v846, 1e-06
        %v850 = vrsqrt.pop %v847
        %v851 = vrsqrt.pop %v848
        %v852 = vrsqrt.pop %v849
        %v853 = vmul.f32 %v831, %v850
        %v854 = vmul.f32 %v832, %v851
        %v855 = vmul.f32 %v833, %v852
        %v857 = vlaneseq
        %v858 = vshrl.u32 %v857, 7
        %v859 = vsub.s32 0, %v858
        %v860 = vrot.slane %v818, %v859
        %v862 = vmul.f32 %v853, %v860
        %v863 = vmul.f32 %v854, %v860
        %v864 = vmul.f32 %v855, %v860
        %v866 = vlaneseq
        %v867 = vshrl.u32 %v866, 7
        %v868 = vsub.s32 0, %v867
        %v869 = vrot.slane %v819, %v868
        %v871 = vadd.f32 %v862, %v869
        %v872 = vadd.f32 %v863, %v869
        %v873 = vadd.f32 %v864, %v869
        %v874 = vpack.c.bf16 %v872, %v871
        %v875 = vpack.c.bf16 %v873, %v873
        %v876 = vld [vmem:[%s7] sm:$0xff]
        %v877 = vld [vmem:[%s7 + $0x8] sm:$0xf]
        %v878 = vld [vmem:[%s7 + $0xc] sm:$0xff]
        %v879 = vld [vmem:[%s7 + $0x14] sm:$0xf]
        %v880 = vld [vmem:[%s7 + $0x18] sm:$0xff]
        %v881 = vld [vmem:[%s7 + $0x20] sm:$0xf]
        %v882 = vld [vmem:[%s7 + $0x24] sm:$0xff]
        %v883 = vld [vmem:[%s7 + $0x2c] sm:$0xf]
        %v884 = vld [vmem:[%s7 + $0x30] sm:$0xff]
        %v885 = vld [vmem:[%s7 + $0x38] sm:$0xf]
        %v886 = vld [vmem:[%s7 + $0x3c] sm:$0xff]
        %v887 = vld [vmem:[%s7 + $0x44] sm:$0xf]
        %v888 = vld [vmem:[%s7 + $0x48] sm:$0xff]
        %v889 = vld [vmem:[%s7 + $0x50] sm:$0xf]
        %v890 = vld [vmem:[%s7 + $0x54] sm:$0xff]
        %v891 = vld [vmem:[%s7 + $0x5c] sm:$0xf]
        %v892 = vld [vmem:[%s7 + $0x60] sm:$0xff]
        %v893 = vld [vmem:[%s7 + $0x68] sm:$0xf]
        %v894 = vld [vmem:[%s7 + $0x6c] sm:$0xff]
        %v895 = vld [vmem:[%s7 + $0x74] sm:$0xf]
        %v896 = vld [vmem:[%s7 + $0x78] sm:$0xff]
        %v897 = vld [vmem:[%s7 + $0x80] sm:$0xf]
        %v898 = vld [vmem:[%s7 + $0x84] sm:$0xff]
        %v899 = vld [vmem:[%s7 + $0x8c] sm:$0xf]
        %v900 = vld [vmem:[%s7 + $0x90] sm:$0xff]
        %v901 = vld [vmem:[%s7 + $0x98] sm:$0xf]
        %v902 = vld [vmem:[%s7 + $0x9c] sm:$0xff]
        %v903 = vld [vmem:[%s7 + $0xa4] sm:$0xf]
        %v904 = vld [vmem:[%s7 + $0xa8] sm:$0xff]
        %v905 = vld [vmem:[%s7 + $0xb0] sm:$0xf]
        %v906 = vld [vmem:[%s7 + $0xb4] sm:$0xff]
        %v907 = vld [vmem:[%s7 + $0xbc] sm:$0xf]
        %v908 = vld [vmem:[%s8] sm:$0x7]
        %v910 = vlaneseq
        %v911 = vshrl.u32 %v910, 7
        %v912 = vsub.s32 0, %v911
        %v913 = vrot.slane %v908, %v912
        %v914 = vlaneseq
        %v915 = vshrl.u32 %v914, 7
        %v916 = vsub.s32 1, %v915
        %v917 = vrot.slane %v908, %v916
        %v918 = vlaneseq
        %v919 = vshrl.u32 %v918, 7
        %v920 = vsub.s32 2, %v919
        %v921 = vrot.slane %v908, %v920
        %v957 = vunpack.c.l.b16 %v876
        %v958 = vunpack.c.h.b16 %v876
        %v959 = vunpack.c.l.b16 %v877
        %v960 = vunpack.c.l.b16 %v878
        %v961 = vunpack.c.h.b16 %v878
        %v962 = vunpack.c.l.b16 %v879
        %v963 = vunpack.c.l.b16 %v880
        %v964 = vunpack.c.h.b16 %v880
        %v965 = vunpack.c.l.b16 %v881
        %v966 = vunpack.c.l.b16 %v882
        %v967 = vunpack.c.h.b16 %v882
        %v968 = vunpack.c.l.b16 %v883
        %v969 = vunpack.c.l.b16 %v884
        %v970 = vunpack.c.h.b16 %v884
        %v971 = vunpack.c.l.b16 %v885
        %v972 = vunpack.c.l.b16 %v886
        %v973 = vunpack.c.h.b16 %v886
        %v974 = vunpack.c.l.b16 %v887
        %v975 = vunpack.c.l.b16 %v888
        %v976 = vunpack.c.h.b16 %v888
        %v977 = vunpack.c.l.b16 %v889
        %v978 = vunpack.c.l.b16 %v890
        %v979 = vunpack.c.h.b16 %v890
        %v980 = vunpack.c.l.b16 %v891
        %v981 = vunpack.c.l.b16 %v892
        %v982 = vunpack.c.h.b16 %v892
        %v983 = vunpack.c.l.b16 %v893
        %v984 = vunpack.c.l.b16 %v894
        %v985 = vunpack.c.h.b16 %v894
        %v986 = vunpack.c.l.b16 %v895
        %v987 = vunpack.c.l.b16 %v896
        %v988 = vunpack.c.h.b16 %v896
        %v989 = vunpack.c.l.b16 %v897
        %v990 = vunpack.c.l.b16 %v898
        %v991 = vunpack.c.h.b16 %v898
        %v992 = vunpack.c.l.b16 %v899
        %v993 = vunpack.c.l.b16 %v900
        %v994 = vunpack.c.h.b16 %v900
        %v995 = vunpack.c.l.b16 %v901
        %v996 = vunpack.c.l.b16 %v902
        %v997 = vunpack.c.h.b16 %v902
        %v998 = vunpack.c.l.b16 %v903
        %v999 = vunpack.c.l.b16 %v904
        %v1000 = vunpack.c.h.b16 %v904
        %v1001 = vunpack.c.l.b16 %v905
        %v1002 = vunpack.c.l.b16 %v906
        %v1003 = vunpack.c.h.b16 %v906
        %v1004 = vunpack.c.l.b16 %v907
        %v1005 = vpack.c.b16 %v960, %v957
        %v1006 = vpack.c.b16 %v961, %v958
        %v1007 = vpack.c.b16 %v962, %v959
        %v1008 = vpack.c.b16 %v966, %v963
        %v1009 = vpack.c.b16 %v967, %v964
        %v1010 = vpack.c.b16 %v968, %v965
        %v1011 = vpack.c.b16 %v972, %v969
        %v1012 = vpack.c.b16 %v973, %v970
        %v1013 = vpack.c.b16 %v974, %v971
        %v1014 = vpack.c.b16 %v978, %v975
        %v1015 = vpack.c.b16 %v979, %v976
        %v1016 = vpack.c.b16 %v980, %v977
        %v1017 = vpack.c.b16 %v984, %v981
        %v1018 = vpack.c.b16 %v985, %v982
        %v1019 = vpack.c.b16 %v986, %v983
        %v1020 = vpack.c.b16 %v990, %v987
        %v1021 = vpack.c.b16 %v991, %v988
        %v1022 = vpack.c.b16 %v992, %v989
        %v1023 = vpack.c.b16 %v996, %v993
        %v1024 = vpack.c.b16 %v997, %v994
        %v1025 = vpack.c.b16 %v998, %v995
        %v1026 = vpack.c.b16 %v1002, %v999
        %v1027 = vpack.c.b16 %v1003, %v1000
        %v1028 = vpack.c.b16 %v1004, %v1001
        %1053 = vmatprep.subr.bf16.mxu0 %v1027
        %1054 = vmatpush1.bf16.msra.mxu0 %v1026
        %1055 = vmatprep.subr.bf16.mxu0 %v1024
        %1056 = vmatpush1.bf16.msra.mxu0 %v1023
        %1057 = vmatprep.subr.bf16.mxu0 %v1021
        %1058 = vmatpush1.bf16.msra.mxu0 %v1020
        %1059 = vmatprep.subr.bf16.mxu0 %v1018
        %1060 = vmatpush1.bf16.msra.mxu0 %v1017
        %1061 = vmatprep.subr.bf16.mxu0 %v1015
        %1062 = vmatpush1.bf16.msra.mxu0 %v1014
        %1063 = vmatprep.subr.bf16.mxu0 %v1012
        %1064 = vmatpush1.bf16.msra.mxu0 %v1011
        %1065 = vmatprep.subr.bf16.mxu0 %v1009
        %1066 = vmatpush1.bf16.msra.mxu0 %v1008
        %1067 = vmatprep.subr.bf16.mxu0 %v1006
        %1068 = vmatpush1.bf16.msra.mxu0 %v1005
        %1069 = vmatprep.subr.bf16.mxu0 0
        %1070 = vmatpush2.bf16.msra.mxu0 0
        %1071 = vmatprep.subr.bf16.mxu0 0
        %1072 = vmatpush2.bf16.msra.mxu0 0
        %1073 = vmatprep.subr.bf16.mxu0 0
        %1074 = vmatpush2.bf16.msra.mxu0 0
        %1075 = vmatprep.subr.bf16.mxu0 0
        %1076 = vmatpush2.bf16.msra.mxu0 0
        %1077 = vmatprep.subr.bf16.mxu0 0
        %1078 = vmatpush2.bf16.msra.mxu0 0
        %1079 = vmatprep.subr.bf16.mxu0 0
        %1080 = vmatpush2.bf16.msra.mxu0 0
        %1081 = vmatprep.subr.bf16.mxu0 0
        %1082 = vmatpush2.bf16.msra.mxu0 0
        %1083 = vmatprep.subr.bf16.mxu0 0
        %1084 = vmatpush2.bf16.msra.mxu0 0
        %1085 = vmatprep.mubr.bf16.mxu0 0
        %1086 = vmatmul.mubr.bf16.gmra.mxu0 %v874
        %v1087 = vpop.f32.mrf.mxu0
        %v1088 = vadd.f32 %v913, %v1087
        %v1089 = vpop.f32.mrf.mxu0
        %v1090 = vadd.f32 %v917, %v1089
        %v1091 = vpop.f32.mrf.mxu0
        %v1092 = vadd.f32 %v913, %v1091
        %v1093 = vpop.f32.mrf.mxu0
        %v1094 = vadd.f32 %v917, %v1093
        %1095 = vmatprep.mubr.bf16.mxu0 0
        %1096 = vmatmul.mubr.bf16.gmra.mxu0 %v875
        %v1097 = vpop.f32.mrf.mxu0
        %v1098 = vadd.f32 %v913, %v1097
        %v1099 = vpop.f32.mrf.mxu0
        %v1100 = vadd.f32 %v917, %v1099
        %v1101 = vpop.f32.mrf.mxu0
        %v1102 = vpop.f32.mrf.mxu0
        %1103 = vdwg.mxu0
        %1104 = vmatprep.subr.bf16.mxu0 0
        %1105 = vmatpush1.bf16.msra.mxu0 %v1028
        %1106 = vmatprep.subr.bf16.mxu0 0
        %1107 = vmatpush1.bf16.msra.mxu0 %v1025
        %1108 = vmatprep.subr.bf16.mxu0 0
        %1109 = vmatpush1.bf16.msra.mxu0 %v1022
        %1110 = vmatprep.subr.bf16.mxu0 0
        %1111 = vmatpush1.bf16.msra.mxu0 %v1019
        %1112 = vmatprep.subr.bf16.mxu0 0
        %1113 = vmatpush1.bf16.msra.mxu0 %v1016
        %1114 = vmatprep.subr.bf16.mxu0 0
        %1115 = vmatpush1.bf16.msra.mxu0 %v1013
        %1116 = vmatprep.subr.bf16.mxu0 0
        %1117 = vmatpush1.bf16.msra.mxu0 %v1010
        %1118 = vmatprep.subr.bf16.mxu0 0
        %1119 = vmatpush1.bf16.msra.mxu0 %v1007
        %1120 = vmatprep.subr.bf16.mxu0 0
        %1121 = vmatpush2.bf16.msra.mxu0 0
        %1122 = vmatprep.subr.bf16.mxu0 0
        %1123 = vmatpush2.bf16.msra.mxu0 0
        %1124 = vmatprep.subr.bf16.mxu0 0
        %1125 = vmatpush2.bf16.msra.mxu0 0
        %1126 = vmatprep.subr.bf16.mxu0 0
        %1127 = vmatpush2.bf16.msra.mxu0 0
        %1128 = vmatprep.subr.bf16.mxu0 0
        %1129 = vmatpush2.bf16.msra.mxu0 0
        %1130 = vmatprep.subr.bf16.mxu0 0
        %1131 = vmatpush2.bf16.msra.mxu0 0
        %1132 = vmatprep.subr.bf16.mxu0 0
        %1133 = vmatpush2.bf16.msra.mxu0 0
        %1134 = vmatprep.subr.bf16.mxu0 0
        %1135 = vmatpush2.bf16.msra.mxu0 0
        %1136 = vmatprep.mubr.bf16.mxu0 0
        %1137 = vmatmul.mubr.bf16.gmra.mxu0 %v874
        %v1138 = vpop.f32.mrf.mxu0
        %v1139 = vadd.f32 %v921, %v1138
        %v1140 = vpop.f32.mrf.mxu0
        %v1141 = vpop.f32.mrf.mxu0
        %v1142 = vadd.f32 %v921, %v1141
        %v1143 = vpop.f32.mrf.mxu0
        %1144 = vmatprep.mubr.bf16.mxu0 0
        %1145 = vmatmul.mubr.bf16.gmra.mxu0 %v875
        %v1146 = vpop.f32.mrf.mxu0
        %v1147 = vadd.f32 %v921, %v1146
        %v1148 = vpop.f32.mrf.mxu0
        %v1149 = vpop.f32.mrf.mxu0
        %v1150 = vpop.f32.mrf.mxu0
        %1151 = vdwg.mxu0
        %v1152 = vmul.f32 %v1088, 0.125
        %v1153 = vmul.f32 %v1092, 0.125
        %v1154 = vmul.f32 %v1098, 0.125
        %v1155 = vpack.c.bf16 %v1153, %v1152
        %v1156 = vpack.c.bf16 %v1154, %v1154
        %v1157 = vpack.c.bf16 %v1094, %v1090
        %v1158 = vpack.c.bf16 %v1100, %v1100
        %v1159 = vpack.c.bf16 %v1142, %v1139
        %v1160 = vpack.c.bf16 %v1147, %v1147
        %v1162 = vsel %vm758, %v1155, 0
        %v1165 = vsel %vm758, %v1156, 0
        %v1168 = vsel %vm758, %v1157, 0
        %v1171 = vsel %vm758, %v1158, 0
        %1173 = vmatprep.subr.bf16.mxu0 0
        %1174 = vmatpush1.bf16.xpose.msra.mxu0 0
        %1175 = vmatprep.subr.bf16.mxu0 0
        %1176 = vmatpush1.bf16.xpose.msra.mxu0 0
        %1177 = vmatprep.subr.bf16.mxu0 0
        %1178 = vmatpush1.bf16.xpose.msra.mxu0 0
        %1179 = vmatprep.subr.bf16.mxu0 0
        %1180 = vmatpush1.bf16.xpose.msra.mxu0 0
        %1181 = vmatprep.subr.bf16.mxu0 0
        %1182 = vmatpush1.bf16.xpose.msra.mxu0 0
        %1183 = vmatprep.subr.bf16.mxu0 0
        %1184 = vmatpush1.bf16.xpose.msra.mxu0 0
        %1185 = vmatprep.subr.bf16.mxu0 0
        %1186 = vmatpush1.bf16.xpose.msra.mxu0 %v1171
        %1187 = vmatprep.subr.bf16.mxu0 0
        %1188 = vmatpush1.bf16.xpose.msra.mxu0 %v1168
        %1189 = vmatprep.subr.bf16.mxu0 0
        %1190 = vmatpush2.bf16.xpose.msra.mxu0 0
        %1191 = vmatprep.subr.bf16.mxu0 0
        %1192 = vmatpush2.bf16.xpose.msra.mxu0 0
        %1193 = vmatprep.subr.bf16.mxu0 0
        %1194 = vmatpush2.bf16.xpose.msra.mxu0 0
        %1195 = vmatprep.subr.bf16.mxu0 0
        %1196 = vmatpush2.bf16.xpose.msra.mxu0 0
        %1197 = vmatprep.subr.bf16.mxu0 0
        %1198 = vmatpush2.bf16.xpose.msra.mxu0 0
        %1199 = vmatprep.subr.bf16.mxu0 0
        %1200 = vmatpush2.bf16.xpose.msra.mxu0 0
        %1201 = vmatprep.subr.bf16.mxu0 0
        %1202 = vmatpush2.bf16.xpose.msra.mxu0 0
        %1203 = vmatprep.subr.bf16.mxu0 0
        %1204 = vmatpush2.bf16.xpose.msra.mxu0 0
        %1205 = vmatprep.mubr.bf16.mxu0 0
        %1206 = vmatmul.mubr.bf16.gmra.mxu0 %v1162
        %v1207 = vpop.f32.mrf.mxu0
        %v1208 = vadd.f32 0.0, %v1207
        %v1209 = vpop.f32.mrf.mxu0
        %v1210 = vpop.f32.mrf.mxu0
        %v1211 = vadd.f32 0.0, %v1210
        %v1212 = vpop.f32.mrf.mxu0
        %1213 = vmatprep.mubr.bf16.mxu0 0
        %1214 = vmatmul.mubr.bf16.gmra.mxu0 %v1165
        %v1215 = vpop.f32.mrf.mxu0
        %v1216 = vadd.f32 0.0, %v1215
        %v1217 = vpop.f32.mrf.mxu0
        %v1218 = vpop.f32.mrf.mxu0
        %v1219 = vpop.f32.mrf.mxu0
        %1220 = vdwg.mxu0
        %vm1221 = vcmask 138240
        %v1222 = vsel %vm1221, %v1208, -inf
        %1223 = vmax.xlane.f32.xlu0 %v1222
        %v1224 = vpop.xlane.xlu0 %1223
        %v1225 = vsel %vm1221, %v1211, -inf
        %1226 = vmax.xlane.f32.xlu0 %v1225
        %v1227 = vpop.xlane.xlu0 %1226
        %vm1228 = vcmask 131072
        %v1229 = vsel %vm1228, %v1216, -inf
        %1230 = vmax.xlane.f32.xlu0 %v1229
        %v1231 = vpop.xlane.xlu0 %1230
        %v1232 = vsub.f32 %v1208, %v1224
        %v1233 = vsub.f32 %v1211, %v1227
        %v1234 = vsub.f32 %v1216, %v1231
        %v1235 = vmul.f32 %v1232, 1.442695
        %v1236 = vpow.pop %v1235
        %v1237 = vmul.f32 %v1233, 1.442695
        %v1238 = vpow.pop %v1237
        %v1239 = vmul.f32 %v1234, 1.442695
        %v1240 = vpow.pop %v1239
        %v1241 = vsel %vm1221, %v1236, 0.0
        %1242 = vadd.xlane.f32.xlu0 %v1241
        %v1243 = vpop.xlane.xlu0 %1242
        %v1244 = vsel %vm1221, %v1238, 0.0
        %1245 = vadd.xlane.f32.xlu0 %v1244
        %v1246 = vpop.xlane.xlu0 %1245
        %v1247 = vsel %vm1228, %v1240, 0.0
        %1248 = vadd.xlane.f32.xlu0 %v1247
        %v1249 = vpop.xlane.xlu0 %1248
        %v1250 = vrcp.pop %v1243
        %v1251 = vrcp.pop %v1246
        %v1252 = vrcp.pop %v1249
        %v1253 = vpack.c.bf16 %v1238, %v1236
        %v1254 = vpack.c.bf16 %v1240, %v1240
        %v1256 = vsel %vm1221, %v1253, 0
        %v1259 = vsel %vm1221, %v1254, 0
        %v1261 = vsel 0, 4294967295, 65535
        %v1262 = vsel %vm810, %v1261, 0
        %v1264 = vand.u32 %v1160, %v1262
        %1266 = vmatprep.subr.bf16.mxu0 0
        %1267 = vmatpush1.bf16.msra.mxu0 0
        %1268 = vmatprep.subr.bf16.mxu0 0
        %1269 = vmatpush1.bf16.msra.mxu0 0
        %1270 = vmatprep.subr.bf16.mxu0 0
        %1271 = vmatpush1.bf16.msra.mxu0 0
        %1272 = vmatprep.subr.bf16.mxu0 0
        %1273 = vmatpush1.bf16.msra.mxu0 0
        %1274 = vmatprep.subr.bf16.mxu0 0
        %1275 = vmatpush1.bf16.msra.mxu0 0
        %1276 = vmatprep.subr.bf16.mxu0 0
        %1277 = vmatpush1.bf16.msra.mxu0 0
        %1278 = vmatprep.subr.bf16.mxu0 0
        %1279 = vmatpush1.bf16.msra.mxu0 %v1264
        %1280 = vmatprep.subr.bf16.mxu0 0
        %1281 = vmatpush1.bf16.msra.mxu0 %v1159
        %1282 = vmatprep.subr.bf16.mxu0 0
        %1283 = vmatpush2.bf16.msra.mxu0 0
        %1284 = vmatprep.subr.bf16.mxu0 0
        %1285 = vmatpush2.bf16.msra.mxu0 0
        %1286 = vmatprep.subr.bf16.mxu0 0
        %1287 = vmatpush2.bf16.msra.mxu0 0
        %1288 = vmatprep.subr.bf16.mxu0 0
        %1289 = vmatpush2.bf16.msra.mxu0 0
        %1290 = vmatprep.subr.bf16.mxu0 0
        %1291 = vmatpush2.bf16.msra.mxu0 0
        %1292 = vmatprep.subr.bf16.mxu0 0
        %1293 = vmatpush2.bf16.msra.mxu0 0
        %1294 = vmatprep.subr.bf16.mxu0 0
        %1295 = vmatpush2.bf16.msra.mxu0 0
        %1296 = vmatprep.subr.bf16.mxu0 0
        %1297 = vmatpush2.bf16.msra.mxu0 0
        %1298 = vmatprep.mubr.bf16.mxu0 0
        %1299 = vmatmul.mubr.bf16.gmra.mxu0 %v1256
        %v1300 = vpop.f32.mrf.mxu0
        %v1301 = vadd.f32 0.0, %v1300
        %v1302 = vpop.f32.mrf.mxu0
        %v1303 = vpop.f32.mrf.mxu0
        %v1304 = vadd.f32 0.0, %v1303
        %v1305 = vpop.f32.mrf.mxu0
        %1306 = vmatprep.mubr.bf16.mxu0 0
        %1307 = vmatmul.mubr.bf16.gmra.mxu0 %v1259
        %v1308 = vpop.f32.mrf.mxu0
        %v1309 = vadd.f32 0.0, %v1308
        %v1310 = vpop.f32.mrf.mxu0
        %v1311 = vpop.f32.mrf.mxu0
        %v1312 = vpop.f32.mrf.mxu0
        %1313 = vdwg.mxu0
        %v1314 = vmul.f32 %v1301, %v1250
        %v1315 = vmul.f32 %v1304, %v1251
        %v1316 = vmul.f32 %v1309, %v1252
        %1319 = vrot.lane.b32.xlu0 %v1155, 64
        %v1320 = vpop.permute.xlu0 %1319
        %1321 = vrot.lane.b32.xlu0 %v1156, 64
        %v1322 = vpop.permute.xlu0 %1321
        %1325 = vrot.lane.b32.xlu0 %v1157, 64
        %v1326 = vpop.permute.xlu0 %1325
        %1327 = vrot.lane.b32.xlu0 %v1158, 64
        %v1328 = vpop.permute.xlu0 %1327
        %v1330 = vsel %vm758, %v1320, 0
        %v1333 = vsel %vm758, %v1322, 0
        %v1336 = vsel %vm758, %v1326, 0
        %v1339 = vsel %vm758, %v1328, 0
        %1341 = vmatprep.subr.bf16.mxu0 0
        %1342 = vmatpush1.bf16.xpose.msra.mxu0 0
        %1343 = vmatprep.subr.bf16.mxu0 0
        %1344 = vmatpush1.bf16.xpose.msra.mxu0 0
        %1345 = vmatprep.subr.bf16.mxu0 0
        %1346 = vmatpush1.bf16.xpose.msra.mxu0 0
        %1347 = vmatprep.subr.bf16.mxu0 0
        %1348 = vmatpush1.bf16.xpose.msra.mxu0 0
        %1349 = vmatprep.subr.bf16.mxu0 0
        %1350 = vmatpush1.bf16.xpose.msra.mxu0 0
        %1351 = vmatprep.subr.bf16.mxu0 0
        %1352 = vmatpush1.bf16.xpose.msra.mxu0 0
        %1353 = vmatprep.subr.bf16.mxu0 0
        %1354 = vmatpush1.bf16.xpose.msra.mxu0 %v1339
        %1355 = vmatprep.subr.bf16.mxu0 0
        %1356 = vmatpush1.bf16.xpose.msra.mxu0 %v1336
        %1357 = vmatprep.subr.bf16.mxu0 0
        %1358 = vmatpush2.bf16.xpose.msra.mxu0 0
        %1359 = vmatprep.subr.bf16.mxu0 0
        %1360 = vmatpush2.bf16.xpose.msra.mxu0 0
        %1361 = vmatprep.subr.bf16.mxu0 0
        %1362 = vmatpush2.bf16.xpose.msra.mxu0 0
        %1363 = vmatprep.subr.bf16.mxu0 0
        %1364 = vmatpush2.bf16.xpose.msra.mxu0 0
        %1365 = vmatprep.subr.bf16.mxu0 0
        %1366 = vmatpush2.bf16.xpose.msra.mxu0 0
        %1367 = vmatprep.subr.bf16.mxu0 0
        %1368 = vmatpush2.bf16.xpose.msra.mxu0 0
        %1369 = vmatprep.subr.bf16.mxu0 0
        %1370 = vmatpush2.bf16.xpose.msra.mxu0 0
        %1371 = vmatprep.subr.bf16.mxu0 0
        %1372 = vmatpush2.bf16.xpose.msra.mxu0 0
        %1373 = vmatprep.mubr.bf16.mxu0 0
        %1374 = vmatmul.mubr.bf16.gmra.mxu0 %v1330
        %v1375 = vpop.f32.mrf.mxu0
        %v1376 = vadd.f32 0.0, %v1375
        %v1377 = vpop.f32.mrf.mxu0
        %v1378 = vpop.f32.mrf.mxu0
        %v1379 = vadd.f32 0.0, %v1378
        %v1380 = vpop.f32.mrf.mxu0
        %1381 = vmatprep.mubr.bf16.mxu0 0
        %1382 = vmatmul.mubr.bf16.gmra.mxu0 %v1333
        %v1383 = vpop.f32.mrf.mxu0
        %v1384 = vadd.f32 0.0, %v1383
        %v1385 = vpop.f32.mrf.mxu0
        %v1386 = vpop.f32.mrf.mxu0
        %v1387 = vpop.f32.mrf.mxu0
        %1388 = vdwg.mxu0
        %v1389 = vsel %vm1221, %v1376, -inf
        %1390 = vmax.xlane.f32.xlu0 %v1389
        %v1391 = vpop.xlane.xlu0 %1390
        %v1392 = vsel %vm1221, %v1379, -inf
        %1393 = vmax.xlane.f32.xlu0 %v1392
        %v1394 = vpop.xlane.xlu0 %1393
        %v1395 = vsel %vm1228, %v1384, -inf
        %1396 = vmax.xlane.f32.xlu0 %v1395
        %v1397 = vpop.xlane.xlu0 %1396
        %v1398 = vsub.f32 %v1376, %v1391
        %v1399 = vsub.f32 %v1379, %v1394
        %v1400 = vsub.f32 %v1384, %v1397
        %v1401 = vmul.f32 %v1398, 1.442695
        %v1402 = vpow.pop %v1401
        %v1403 = vmul.f32 %v1399, 1.442695
        %v1404 = vpow.pop %v1403
        %v1405 = vmul.f32 %v1400, 1.442695
        %v1406 = vpow.pop %v1405
        %v1407 = vsel %vm1221, %v1402, 0.0
        %1408 = vadd.xlane.f32.xlu0 %v1407
        %v1409 = vpop.xlane.xlu0 %1408
        %v1410 = vsel %vm1221, %v1404, 0.0
        %1411 = vadd.xlane.f32.xlu0 %v1410
        %v1412 = vpop.xlane.xlu0 %1411
        %v1413 = vsel %vm1228, %v1406, 0.0
        %1414 = vadd.xlane.f32.xlu0 %v1413
        %v1415 = vpop.xlane.xlu0 %1414
        %v1416 = vrcp.pop %v1409
        %v1417 = vrcp.pop %v1412
        %v1418 = vrcp.pop %v1415
        %v1419 = vpack.c.bf16 %v1404, %v1402
        %v1420 = vpack.c.bf16 %v1406, %v1406
        %1423 = vrot.lane.b32.xlu0 %v1159, 64
        %v1424 = vpop.permute.xlu0 %1423
        %1425 = vrot.lane.b32.xlu0 %v1160, 64
        %v1426 = vpop.permute.xlu0 %1425
        %v1429 = vsel %vm1221, %v1419, 0
        %v1432 = vsel %vm1221, %v1420, 0
        %v1435 = vand.u32 %v1426, %v1262
        %1437 = vmatprep.subr.bf16.mxu0 0
        %1438 = vmatpush1.bf16.msra.mxu0 0
        %1439 = vmatprep.subr.bf16.mxu0 0
        %1440 = vmatpush1.bf16.msra.mxu0 0
        %1441 = vmatprep.subr.bf16.mxu0 0
        %1442 = vmatpush1.bf16.msra.mxu0 0
        %1443 = vmatprep.subr.bf16.mxu0 0
        %1444 = vmatpush1.bf16.msra.mxu0 0
        %1445 = vmatprep.subr.bf16.mxu0 0
        %1446 = vmatpush1.bf16.msra.mxu0 0
        %1447 = vmatprep.subr.bf16.mxu0 0
        %1448 = vmatpush1.bf16.msra.mxu0 0
        %1449 = vmatprep.subr.bf16.mxu0 0
        %1450 = vmatpush1.bf16.msra.mxu0 %v1435
        %1451 = vmatprep.subr.bf16.mxu0 0
        %1452 = vmatpush1.bf16.msra.mxu0 %v1424
        %1453 = vmatprep.subr.bf16.mxu0 0
        %1454 = vmatpush2.bf16.msra.mxu0 0
        %1455 = vmatprep.subr.bf16.mxu0 0
        %1456 = vmatpush2.bf16.msra.mxu0 0
        %1457 = vmatprep.subr.bf16.mxu0 0
        %1458 = vmatpush2.bf16.msra.mxu0 0
        %1459 = vmatprep.subr.bf16.mxu0 0
        %1460 = vmatpush2.bf16.msra.mxu0 0
        %1461 = vmatprep.subr.bf16.mxu0 0
        %1462 = vmatpush2.bf16.msra.mxu0 0
        %1463 = vmatprep.subr.bf16.mxu0 0
        %1464 = vmatpush2.bf16.msra.mxu0 0
        %1465 = vmatprep.subr.bf16.mxu0 0
        %1466 = vmatpush2.bf16.msra.mxu0 0
        %1467 = vmatprep.subr.bf16.mxu0 0
        %1468 = vmatpush2.bf16.msra.mxu0 0
        %1469 = vmatprep.mubr.bf16.mxu0 0
        %1470 = vmatmul.mubr.bf16.gmra.mxu0 %v1429
        %v1471 = vpop.f32.mrf.mxu0
        %v1472 = vadd.f32 0.0, %v1471
        %v1473 = vpop.f32.mrf.mxu0
        %v1474 = vpop.f32.mrf.mxu0
        %v1475 = vadd.f32 0.0, %v1474
        %v1476 = vpop.f32.mrf.mxu0
        %1477 = vmatprep.mubr.bf16.mxu0 0
        %1478 = vmatmul.mubr.bf16.gmra.mxu0 %v1432
        %v1479 = vpop.f32.mrf.mxu0
        %v1480 = vadd.f32 0.0, %v1479
        %v1481 = vpop.f32.mrf.mxu0
        %v1482 = vpop.f32.mrf.mxu0
        %v1483 = vpop.f32.mrf.mxu0
        %1484 = vdwg.mxu0
        %v1485 = vmul.f32 %v1472, %v1416
        %v1486 = vmul.f32 %v1475, %v1417
        %v1487 = vmul.f32 %v1480, %v1418
        %1491 = vrot.lane.b32.xlu0 %v1485, 64
        %v1492 = vpop.permute.xlu0 %1491
        %1493 = vrot.lane.b32.xlu0 %v1486, 64
        %v1494 = vpop.permute.xlu0 %1493
        %1495 = vrot.lane.b32.xlu0 %v1487, 64
        %v1496 = vpop.permute.xlu0 %1495
        %v1500 = vsel %vm758, %v1314, %v1492
        %v1501 = vsel %vm758, %v1315, %v1494
        %v1502 = vsel %vm758, %v1316, %v1496
        %v1503 = vpack.c.bf16 %v1501, %v1500
        %v1504 = vpack.c.bf16 %v1502, %v1502
        %v1505 = vld [vmem:[%s9] sm:$0xf]
        %v1506 = vld [vmem:[%s9 + $0x4] sm:$0xf]
        %v1507 = vld [vmem:[%s9 + $0x8] sm:$0xf]
        %v1508 = vld [vmem:[%s9 + $0xc] sm:$0xf]
        %v1509 = vld [vmem:[%s9 + $0x10] sm:$0xf]
        %v1510 = vld [vmem:[%s9 + $0x14] sm:$0xf]
        %v1511 = vld [vmem:[%s9 + $0x18] sm:$0xf]
        %v1512 = vld [vmem:[%s9 + $0x1c] sm:$0xf]
        %v1513 = vld [vmem:[%s9 + $0x20] sm:$0xf]
        %v1514 = vld [vmem:[%s9 + $0x24] sm:$0xf]
        %v1515 = vld [vmem:[%s9 + $0x28] sm:$0xf]
        %v1516 = vld [vmem:[%s9 + $0x2c] sm:$0xf]
        %v1517 = vld [vmem:[%s9 + $0x30] sm:$0xf]
        %v1518 = vld [vmem:[%s9 + $0x34] sm:$0xf]
        %v1519 = vld [vmem:[%s9 + $0x38] sm:$0xf]
        %v1520 = vld [vmem:[%s9 + $0x3c] sm:$0xf]
        %v1521 = vld [vmem:[%s10] sm:$0x1]
        %v1523 = vlaneseq
        %v1524 = vshrl.u32 %v1523, 7
        %v1525 = vsub.s32 0, %v1524
        %v1526 = vrot.slane %v1521, %v1525
        %v1544 = vunpack.c.l.b16 %v1505
        %v1545 = vunpack.c.l.b16 %v1506
        %v1546 = vunpack.c.l.b16 %v1507
        %v1547 = vunpack.c.l.b16 %v1508
        %v1548 = vunpack.c.l.b16 %v1509
        %v1549 = vunpack.c.l.b16 %v1510
        %v1550 = vunpack.c.l.b16 %v1511
        %v1551 = vunpack.c.l.b16 %v1512
        %v1552 = vunpack.c.l.b16 %v1513
        %v1553 = vunpack.c.l.b16 %v1514
        %v1554 = vunpack.c.l.b16 %v1515
        %v1555 = vunpack.c.l.b16 %v1516
        %v1556 = vunpack.c.l.b16 %v1517
        %v1557 = vunpack.c.l.b16 %v1518
        %v1558 = vunpack.c.l.b16 %v1519
        %v1559 = vunpack.c.l.b16 %v1520
        %v1560 = vpack.c.b16 %v1545, %v1544
        %v1561 = vpack.c.b16 %v1547, %v1546
        %v1562 = vpack.c.b16 %v1549, %v1548
        %v1563 = vpack.c.b16 %v1551, %v1550
        %v1564 = vpack.c.b16 %v1553, %v1552
        %v1565 = vpack.c.b16 %v1555, %v1554
        %v1566 = vpack.c.b16 %v1557, %v1556
        %v1567 = vpack.c.b16 %v1559, %v1558
        %1576 = vmatprep.subr.bf16.mxu0 0
        %1577 = vmatpush1.bf16.msra.mxu0 %v1567
        %1578 = vmatprep.subr.bf16.mxu0 0
        %1579 = vmatpush1.bf16.msra.mxu0 %v1566
        %1580 = vmatprep.subr.bf16.mxu0 0
        %1581 = vmatpush1.bf16.msra.mxu0 %v1565
        %1582 = vmatprep.subr.bf16.mxu0 0
        %1583 = vmatpush1.bf16.msra.mxu0 %v1564
        %1584 = vmatprep.subr.bf16.mxu0 0
        %1585 = vmatpush1.bf16.msra.mxu0 %v1563
        %1586 = vmatprep.subr.bf16.mxu0 0
        %1587 = vmatpush1.bf16.msra.mxu0 %v1562
        %1588 = vmatprep.subr.bf16.mxu0 0
        %1589 = vmatpush1.bf16.msra.mxu0 %v1561
        %1590 = vmatprep.subr.bf16.mxu0 0
        %1591 = vmatpush1.bf16.msra.mxu0 %v1560
        %1592 = vmatprep.subr.bf16.mxu0 0
        %1593 = vmatpush2.bf16.msra.mxu0 0
        %1594 = vmatprep.subr.bf16.mxu0 0
        %1595 = vmatpush2.bf16.msra.mxu0 0
        %1596 = vmatprep.subr.bf16.mxu0 0
        %1597 = vmatpush2.bf16.msra.mxu0 0
        %1598 = vmatprep.subr.bf16.mxu0 0
        %1599 = vmatpush2.bf16.msra.mxu0 0
        %1600 = vmatprep.subr.bf16.mxu0 0
        %1601 = vmatpush2.bf16.msra.mxu0 0
        %1602 = vmatprep.subr.bf16.mxu0 0
        %1603 = vmatpush2.bf16.msra.mxu0 0
        %1604 = vmatprep.subr.bf16.mxu0 0
        %1605 = vmatpush2.bf16.msra.mxu0 0
        %1606 = vmatprep.subr.bf16.mxu0 0
        %1607 = vmatpush2.bf16.msra.mxu0 0
        %1608 = vmatprep.mubr.bf16.mxu0 0
        %1609 = vmatmul.mubr.bf16.gmra.mxu0 %v1503
        %v1610 = vpop.f32.mrf.mxu0
        %v1611 = vadd.f32 %v1526, %v1610
        %v1612 = vpop.f32.mrf.mxu0
        %v1613 = vpop.f32.mrf.mxu0
        %v1614 = vadd.f32 %v1526, %v1613
        %v1615 = vpop.f32.mrf.mxu0
        %1616 = vmatprep.mubr.bf16.mxu0 0
        %1617 = vmatmul.mubr.bf16.gmra.mxu0 %v1504
        %v1618 = vpop.f32.mrf.mxu0
        %v1619 = vadd.f32 %v1526, %v1618
        %v1620 = vpop.f32.mrf.mxu0
        %v1621 = vpop.f32.mrf.mxu0
        %v1622 = vpop.f32.mrf.mxu0
        %1623 = vdwg.mxu0
        %v1624 = vadd.f32 %v817, %v1611
        %v1625 = vadd.f32 %v813, %v1614
        %v1626 = vadd.f32 %v812, %v1619
        %v1627 = vld [vmem:[%s11] sm:$0x1]
        %v1628 = vld [vmem:[%s12] sm:$0x1]
        %1629 = vadd.xlane.f32.xlu0 %v1624
        %v1630 = vpop.xlane.xlu0 %1629
        %1631 = vadd.xlane.f32.xlu0 %v1625
        %v1632 = vpop.xlane.xlu0 %1631
        %v1633 = vsel %vm810, %v1626, 0.0
        %1634 = vadd.xlane.f32.xlu0 %v1633
        %v1635 = vpop.xlane.xlu0 %1634
        %v1636 = vmul.f32 %v1630, %v827
        %v1637 = vmul.f32 %v1632, %v827
        %v1638 = vmul.f32 %v1635, %v827
        %v1639 = vsub.f32 %v1624, %v1636
        %v1640 = vsub.f32 %v1625, %v1637
        %v1641 = vsub.f32 %v1626, %v1638
        %v1642 = vmul.f32 %v1639, %v1639
        %v1643 = vmul.f32 %v1640, %v1640
        %v1644 = vmul.f32 %v1641, %v1641
        %1645 = vadd.xlane.f32.xlu0 %v1642
        %v1646 = vpop.xlane.xlu0 %1645
        %1647 = vadd.xlane.f32.xlu0 %v1643
        %v1648 = vpop.xlane.xlu0 %1647
        %v1649 = vsel %vm810, %v1644, 0.0
        %1650 = vadd.xlane.f32.xlu0 %v1649
        %v1651 = vpop.xlane.xlu0 %1650
        %v1652 = vmul.f32 %v1646, %v827
        %v1653 = vmul.f32 %v1648, %v827
        %v1654 = vmul.f32 %v1651, %v827
        %v1655 = vadd.f32 %v1652, 1e-06
        %v1656 = vadd.f32 %v1653, 1e-06
        %v1657 = vadd.f32 %v1654, 1e-06
        %v1658 = vrsqrt.pop %v1655
        %v1659 = vrsqrt.pop %v1656
        %v1660 = vrsqrt.pop %v1657
        %v1661 = vmul.f32 %v1639, %v1658
        %v1662 = vmul.f32 %v1640, %v1659
        %v1663 = vmul.f32 %v1641, %v1660
        %v1665 = vlaneseq
        %v1666 = vshrl.u32 %v1665, 7
        %v1667 = vsub.s32 0, %v1666
        %v1668 = vrot.slane %v1627, %v1667
        %v1670 = vmul.f32 %v1661, %v1668
        %v1671 = vmul.f32 %v1662, %v1668
        %v1672 = vmul.f32 %v1663, %v1668
        %v1674 = vlaneseq
        %v1675 = vshrl.u32 %v1674, 7
        %v1676 = vsub.s32 0, %v1675
        %v1677 = vrot.slane %v1628, %v1676
        %v1679 = vadd.f32 %v1670, %v1677
        %v1680 = vadd.f32 %v1671, %v1677
        %v1681 = vadd.f32 %v1672, %v1677
        %v1682 = vpack.c.bf16 %v1680, %v1679
        %v1683 = vpack.c.bf16 %v1681, %v1681
        %v1684 = vld [vmem:[%s13] sm:$0xff]
        %v1685 = vld [vmem:[%s13 + $0x8] sm:$0xff]
        %v1686 = vld [vmem:[%s13 + $0x10] sm:$0xff]
        %v1687 = vld [vmem:[%s13 + $0x18] sm:$0xff]
        %v1688 = vld [vmem:[%s13 + $0x20] sm:$0xff]
        %v1689 = vld [vmem:[%s13 + $0x28] sm:$0xff]
        %v1690 = vld [vmem:[%s13 + $0x30] sm:$0xff]
        %v1691 = vld [vmem:[%s13 + $0x38] sm:$0xff]
        %v1692 = vld [vmem:[%s13 + $0x40] sm:$0xff]
        %v1693 = vld [vmem:[%s13 + $0x48] sm:$0xff]
        %v1694 = vld [vmem:[%s13 + $0x50] sm:$0xff]
        %v1695 = vld [vmem:[%s13 + $0x58] sm:$0xff]
        %v1696 = vld [vmem:[%s13 + $0x60] sm:$0xff]
        %v1697 = vld [vmem:[%s13 + $0x68] sm:$0xff]
        %v1698 = vld [vmem:[%s13 + $0x70] sm:$0xff]
        %v1699 = vld [vmem:[%s13 + $0x78] sm:$0xff]
        %v1700 = vld [vmem:[%s13 + $0x80] sm:$0xff]
        %v1701 = vld [vmem:[%s13 + $0x88] sm:$0xff]
        %v1702 = vld [vmem:[%s13 + $0x90] sm:$0xff]
        %v1703 = vld [vmem:[%s13 + $0x98] sm:$0xff]
        %v1704 = vld [vmem:[%s13 + $0xa0] sm:$0xff]
        %v1705 = vld [vmem:[%s13 + $0xa8] sm:$0xff]
        %v1706 = vld [vmem:[%s13 + $0xb0] sm:$0xff]
        %v1707 = vld [vmem:[%s13 + $0xb8] sm:$0xff]
        %v1708 = vld [vmem:[%s13 + $0xc0] sm:$0xff]
        %v1709 = vld [vmem:[%s13 + $0xc8] sm:$0xff]
        %v1710 = vld [vmem:[%s13 + $0xd0] sm:$0xff]
        %v1711 = vld [vmem:[%s13 + $0xd8] sm:$0xff]
        %v1712 = vld [vmem:[%s13 + $0xe0] sm:$0xff]
        %v1713 = vld [vmem:[%s13 + $0xe8] sm:$0xff]
        %v1714 = vld [vmem:[%s13 + $0xf0] sm:$0xff]
        %v1715 = vld [vmem:[%s13 + $0xf8] sm:$0xff]
        %v1716 = vld [vmem:[%s14] sm:$0xf]
        %v1718 = vlaneseq
        %v1719 = vshrl.u32 %v1718, 7
        %v1720 = vsub.s32 0, %v1719
        %v1721 = vrot.slane %v1716, %v1720
        %v1722 = vlaneseq
        %v1723 = vshrl.u32 %v1722, 7
        %v1724 = vsub.s32 1, %v1723
        %v1725 = vrot.slane %v1716, %v1724
        %v1726 = vlaneseq
        %v1727 = vshrl.u32 %v1726, 7
        %v1728 = vsub.s32 2, %v1727
        %v1729 = vrot.slane %v1716, %v1728
        %v1730 = vlaneseq
        %v1731 = vshrl.u32 %v1730, 7
        %v1732 = vsub.s32 3, %v1731
        %v1733 = vrot.slane %v1716, %v1732
        %v1770 = vunpack.c.l.b16 %v1684
        %v1771 = vunpack.c.h.b16 %v1684
        %v1772 = vunpack.c.l.b16 %v1685
        %v1773 = vunpack.c.h.b16 %v1685
        %v1774 = vunpack.c.l.b16 %v1686
        %v1775 = vunpack.c.h.b16 %v1686
        %v1776 = vunpack.c.l.b16 %v1687
        %v1777 = vunpack.c.h.b16 %v1687
        %v1778 = vunpack.c.l.b16 %v1688
        %v1779 = vunpack.c.h.b16 %v1688
        %v1780 = vunpack.c.l.b16 %v1689
        %v1781 = vunpack.c.h.b16 %v1689
        %v1782 = vunpack.c.l.b16 %v1690
        %v1783 = vunpack.c.h.b16 %v1690
        %v1784 = vunpack.c.l.b16 %v1691
        %v1785 = vunpack.c.h.b16 %v1691
        %v1786 = vunpack.c.l.b16 %v1692
        %v1787 = vunpack.c.h.b16 %v1692
        %v1788 = vunpack.c.l.b16 %v1693
        %v1789 = vunpack.c.h.b16 %v1693
        %v1790 = vunpack.c.l.b16 %v1694
        %v1791 = vunpack.c.h.b16 %v1694
        %v1792 = vunpack.c.l.b16 %v1695
        %v1793 = vunpack.c.h.b16 %v1695
        %v1794 = vunpack.c.l.b16 %v1696
        %v1795 = vunpack.c.h.b16 %v1696
        %v1796 = vunpack.c.l.b16 %v1697
        %v1797 = vunpack.c.h.b16 %v1697
        %v1798 = vunpack.c.l.b16 %v1698
        %v1799 = vunpack.c.h.b16 %v1698
        %v1800 = vunpack.c.l.b16 %v1699
        %v1801 = vunpack.c.h.b16 %v1699
        %v1802 = vunpack.c.l.b16 %v1700
        %v1803 = vunpack.c.h.b16 %v1700
        %v1804 = vunpack.c.l.b16 %v1701
        %v1805 = vunpack.c.h.b16 %v1701
        %v1806 = vunpack.c.l.b16 %v1702
        %v1807 = vunpack.c.h.b16 %v1702
        %v1808 = vunpack.c.l.b16 %v1703
        %v1809 = vunpack.c.h.b16 %v1703
        %v1810 = vunpack.c.l.b16 %v1704
        %v1811 = vunpack.c.h.b16 %v1704
        %v1812 = vunpack.c.l.b16 %v1705
        %v1813 = vunpack.c.h.b16 %v1705
        %v1814 = vunpack.c.l.b16 %v1706
        %v1815 = vunpack.c.h.b16 %v1706
        %v1816 = vunpack.c.l.b16 %v1707
        %v1817 = vunpack.c.h.b16 %v1707
        %v1818 = vunpack.c.l.b16 %v1708
        %v1819 = vunpack.c.h.b16 %v1708
        %v1820 = vunpack.c.l.b16 %v1709
        %v1821 = vunpack.c.h.b16 %v1709
        %v1822 = vunpack.c.l.b16 %v1710
        %v1823 = vunpack.c.h.b16 %v1710
        %v1824 = vunpack.c.l.b16 %v1711
        %v1825 = vunpack.c.h.b16 %v1711
        %v1826 = vunpack.c.l.b16 %v1712
        %v1827 = vunpack.c.h.b16 %v1712
        %v1828 = vunpack.c.l.b16 %v1713
        %v1829 = vunpack.c.h.b16 %v1713
        %v1830 = vunpack.c.l.b16 %v1714
        %v1831 = vunpack.c.h.b16 %v1714
        %v1832 = vunpack.c.l.b16 %v1715
        %v1833 = vunpack.c.h.b16 %v1715
        %v1834 = vpack.c.b16 %v1774, %v1770
        %v1835 = vpack.c.b16 %v1775, %v1771
        %v1836 = vpack.c.b16 %v1776, %v1772
        %v1837 = vpack.c.b16 %v1777, %v1773
        %v1838 = vpack.c.b16 %v1782, %v1778
        %v1839 = vpack.c.b16 %v1783, %v1779
        %v1840 = vpack.c.b16 %v1784, %v1780
        %v1841 = vpack.c.b16 %v1785, %v1781
        %v1842 = vpack.c.b16 %v1790, %v1786
        %v1843 = vpack.c.b16 %v1791, %v1787
        %v1844 = vpack.c.b16 %v1792, %v1788
        %v1845 = vpack.c.b16 %v1793, %v1789
        %v1846 = vpack.c.b16 %v1798, %v1794
        %v1847 = vpack.c.b16 %v1799, %v1795
        %v1848 = vpack.c.b16 %v1800, %v1796
        %v1849 = vpack.c.b16 %v1801, %v1797
        %v1850 = vpack.c.b16 %v1806, %v1802
        %v1851 = vpack.c.b16 %v1807, %v1803
        %v1852 = vpack.c.b16 %v1808, %v1804
        %v1853 = vpack.c.b16 %v1809, %v1805
        %v1854 = vpack.c.b16 %v1814, %v1810
        %v1855 = vpack.c.b16 %v1815, %v1811
        %v1856 = vpack.c.b16 %v1816, %v1812
        %v1857 = vpack.c.b16 %v1817, %v1813
        %v1858 = vpack.c.b16 %v1822, %v1818
        %v1859 = vpack.c.b16 %v1823, %v1819
        %v1860 = vpack.c.b16 %v1824, %v1820
        %v1861 = vpack.c.b16 %v1825, %v1821
        %v1862 = vpack.c.b16 %v1830, %v1826
        %v1863 = vpack.c.b16 %v1831, %v1827
        %v1864 = vpack.c.b16 %v1832, %v1828
        %v1865 = vpack.c.b16 %v1833, %v1829
        %1898 = vmatprep.subr.bf16.mxu0 %v1863
        %1899 = vmatpush1.bf16.msra.mxu0 %v1862
        %1900 = vmatprep.subr.bf16.mxu0 %v1859
        %1901 = vmatpush1.bf16.msra.mxu0 %v1858
        %1902 = vmatprep.subr.bf16.mxu0 %v1855
        %1903 = vmatpush1.bf16.msra.mxu0 %v1854
        %1904 = vmatprep.subr.bf16.mxu0 %v1851
        %1905 = vmatpush1.bf16.msra.mxu0 %v1850
        %1906 = vmatprep.subr.bf16.mxu0 %v1847
        %1907 = vmatpush1.bf16.msra.mxu0 %v1846
        %1908 = vmatprep.subr.bf16.mxu0 %v1843
        %1909 = vmatpush1.bf16.msra.mxu0 %v1842
        %1910 = vmatprep.subr.bf16.mxu0 %v1839
        %1911 = vmatpush1.bf16.msra.mxu0 %v1838
        %1912 = vmatprep.subr.bf16.mxu0 %v1835
        %1913 = vmatpush1.bf16.msra.mxu0 %v1834
        %1914 = vmatprep.subr.bf16.mxu0 0
        %1915 = vmatpush2.bf16.msra.mxu0 0
        %1916 = vmatprep.subr.bf16.mxu0 0
        %1917 = vmatpush2.bf16.msra.mxu0 0
        %1918 = vmatprep.subr.bf16.mxu0 0
        %1919 = vmatpush2.bf16.msra.mxu0 0
        %1920 = vmatprep.subr.bf16.mxu0 0
        %1921 = vmatpush2.bf16.msra.mxu0 0
        %1922 = vmatprep.subr.bf16.mxu0 0
        %1923 = vmatpush2.bf16.msra.mxu0 0
        %1924 = vmatprep.subr.bf16.mxu0 0
        %1925 = vmatpush2.bf16.msra.mxu0 0
        %1926 = vmatprep.subr.bf16.mxu0 0
        %1927 = vmatpush2.bf16.msra.mxu0 0
        %1928 = vmatprep.subr.bf16.mxu0 0
        %1929 = vmatpush2.bf16.msra.mxu0 0
        %1930 = vmatprep.mubr.bf16.mxu0 0
        %1931 = vmatmul.mubr.bf16.gmra.mxu0 %v1682
        %v1932 = vpop.f32.mrf.mxu0
        %v1933 = vadd.f32 %v1721, %v1932
        %v1934 = vpop.f32.mrf.mxu0
        %v1935 = vadd.f32 %v1725, %v1934
        %v1936 = vpop.f32.mrf.mxu0
        %v1937 = vadd.f32 %v1721, %v1936
        %v1938 = vpop.f32.mrf.mxu0
        %v1939 = vadd.f32 %v1725, %v1938
        %1940 = vmatprep.mubr.bf16.mxu0 0
        %1941 = vmatmul.mubr.bf16.gmra.mxu0 %v1683
        %v1942 = vpop.f32.mrf.mxu0
        %v1943 = vadd.f32 %v1721, %v1942
        %v1944 = vpop.f32.mrf.mxu0
        %v1945 = vadd.f32 %v1725, %v1944
        %v1946 = vpop.f32.mrf.mxu0
        %v1947 = vpop.f32.mrf.mxu0
        %1948 = vdwg.mxu0
        %1949 = vmatprep.subr.bf16.mxu0 %v1865
        %1950 = vmatpush1.bf16.msra.mxu0 %v1864
        %1951 = vmatprep.subr.bf16.mxu0 %v1861
        %1952 = vmatpush1.bf16.msra.mxu0 %v1860
        %1953 = vmatprep.subr.bf16.mxu0 %v1857
        %1954 = vmatpush1.bf16.msra.mxu0 %v1856
        %1955 = vmatprep.subr.bf16.mxu0 %v1853
        %1956 = vmatpush1.bf16.msra.mxu0 %v1852
        %1957 = vmatprep.subr.bf16.mxu0 %v1849
        %1958 = vmatpush1.bf16.msra.mxu0 %v1848
        %1959 = vmatprep.subr.bf16.mxu0 %v1845
        %1960 = vmatpush1.bf16.msra.mxu0 %v1844
        %1961 = vmatprep.subr.bf16.mxu0 %v1841
        %1962 = vmatpush1.bf16.msra.mxu0 %v1840
        %1963 = vmatprep.subr.bf16.mxu0 %v1837
        %1964 = vmatpush1.bf16.msra.mxu0 %v1836
        %1965 = vmatprep.subr.bf16.mxu0 0
        %1966 = vmatpush2.bf16.msra.mxu0 0
        %1967 = vmatprep.subr.bf16.mxu0 0
        %1968 = vmatpush2.bf16.msra.mxu0 0
        %1969 = vmatprep.subr.bf16.mxu0 0
        %1970 = vmatpush2.bf16.msra.mxu0 0
        %1971 = vmatprep.subr.bf16.mxu0 0
        %1972 = vmatpush2.bf16.msra.mxu0 0
        %1973 = vmatprep.subr.bf16.mxu0 0
        %1974 = vmatpush2.bf16.msra.mxu0 0
        %1975 = vmatprep.subr.bf16.mxu0 0
        %1976 = vmatpush2.bf16.msra.mxu0 0
        %1977 = vmatprep.subr.bf16.mxu0 0
        %1978 = vmatpush2.bf16.msra.mxu0 0
        %1979 = vmatprep.subr.bf16.mxu0 0
        %1980 = vmatpush2.bf16.msra.mxu0 0
        %1981 = vmatprep.mubr.bf16.mxu0 0
        %1982 = vmatmul.mubr.bf16.gmra.mxu0 %v1682
        %v1983 = vpop.f32.mrf.mxu0
        %v1984 = vadd.f32 %v1729, %v1983
        %v1985 = vpop.f32.mrf.mxu0
        %v1986 = vadd.f32 %v1733, %v1985
        %v1987 = vpop.f32.mrf.mxu0
        %v1988 = vadd.f32 %v1729, %v1987
        %v1989 = vpop.f32.mrf.mxu0
        %v1990 = vadd.f32 %v1733, %v1989
        %1991 = vmatprep.mubr.bf16.mxu0 0
        %1992 = vmatmul.mubr.bf16.gmra.mxu0 %v1683
        %v1993 = vpop.f32.mrf.mxu0
        %v1994 = vadd.f32 %v1729, %v1993
        %v1995 = vpop.f32.mrf.mxu0
        %v1996 = vadd.f32 %v1733, %v1995
        %v1997 = vpop.f32.mrf.mxu0
        %v1998 = vpop.f32.mrf.mxu0
        %1999 = vdwg.mxu0
        %v2000 = vmul.f32 %v1933, %v1933
        %v2001 = vmul.f32 %v1935, %v1935
        %v2002 = vmul.f32 %v1984, %v1984
        %v2003 = vmul.f32 %v1986, %v1986
        %v2004 = vmul.f32 %v1937, %v1937
        %v2005 = vmul.f32 %v1939, %v1939
        %v2006 = vmul.f32 %v1988, %v1988
        %v2007 = vmul.f32 %v1990, %v1990
        %v2008 = vmul.f32 %v1943, %v1943
        %v2009 = vmul.f32 %v1945, %v1945
        %v2010 = vmul.f32 %v1994, %v1994
        %v2011 = vmul.f32 %v1996, %v1996
        %v2012 = vmul.f32 %v1933, %v2000
        %v2013 = vmul.f32 %v1935, %v2001
        %v2014 = vmul.f32 %v1984, %v2002
        %v2015 = vmul.f32 %v1986, %v2003
        %v2016 = vmul.f32 %v1937, %v2004
        %v2017 = vmul.f32 %v1939, %v2005
        %v2018 = vmul.f32 %v1988, %v2006
        %v2019 = vmul.f32 %v1990, %v2007
        %v2020 = vmul.f32 %v1943, %v2008
        %v2021 = vmul.f32 %v1945, %v2009
        %v2022 = vmul.f32 %v1994, %v2010
        %v2023 = vmul.f32 %v1996, %v2011
        %v2024 = vmul.f32 %v2012, 0.044715
        %v2025 = vmul.f32 %v2013, 0.044715
        %v2026 = vmul.f32 %v2014, 0.044715
        %v2027 = vmul.f32 %v2015, 0.044715
        %v2028 = vmul.f32 %v2016, 0.044715
        %v2029 = vmul.f32 %v2017, 0.044715
        %v2030 = vmul.f32 %v2018, 0.044715
        %v2031 = vmul.f32 %v2019, 0.044715
        %v2032 = vmul.f32 %v2020, 0.044715
        %v2033 = vmul.f32 %v2021, 0.044715
        %v2034 = vmul.f32 %v2022, 0.044715
        %v2035 = vmul.f32 %v2023, 0.044715
        %v2036 = vadd.f32 %v1933, %v2024
        %v2037 = vadd.f32 %v1935, %v2025
        %v2038 = vadd.f32 %v1984, %v2026
        %v2039 = vadd.f32 %v1986, %v2027
        %v2040 = vadd.f32 %v1937, %v2028
        %v2041 = vadd.f32 %v1939, %v2029
        %v2042 = vadd.f32 %v1988, %v2030
        %v2043 = vadd.f32 %v1990, %v2031
        %v2044 = vadd.f32 %v1943, %v2032
        %v2045 = vadd.f32 %v1945, %v2033
        %v2046 = vadd.f32 %v1994, %v2034
        %v2047 = vadd.f32 %v1996, %v2035
        %v2048 = vmul.f32 %v2036, 0.7978846
        %v2049 = vmul.f32 %v2037, 0.7978846
        %v2050 = vmul.f32 %v2038, 0.7978846
        %v2051 = vmul.f32 %v2039, 0.7978846
        %v2052 = vmul.f32 %v2040, 0.7978846
        %v2053 = vmul.f32 %v2041, 0.7978846
        %v2054 = vmul.f32 %v2042, 0.7978846
        %v2055 = vmul.f32 %v2043, 0.7978846
        %v2056 = vmul.f32 %v2044, 0.7978846
        %v2057 = vmul.f32 %v2045, 0.7978846
        %v2058 = vmul.f32 %v2046, 0.7978846
        %v2059 = vmul.f32 %v2047, 0.7978846
        %v2060 = vtanh.pop %v2048
        %v2061 = vtanh.pop %v2049
        %v2062 = vtanh.pop %v2050
        %v2063 = vtanh.pop %v2051
        %v2064 = vtanh.pop %v2052
        %v2065 = vtanh.pop %v2053
        %v2066 = vtanh.pop %v2054
        %v2067 = vtanh.pop %v2055
        %v2068 = vtanh.pop %v2056
        %v2069 = vtanh.pop %v2057
        %v2070 = vtanh.pop %v2058
        %v2071 = vtanh.pop %v2059
        %v2072 = vadd.f32 %v2060, 1.0
        %v2073 = vadd.f32 %v2061, 1.0
        %v2074 = vadd.f32 %v2062, 1.0
        %v2075 = vadd.f32 %v2063, 1.0
        %v2076 = vadd.f32 %v2064, 1.0
        %v2077 = vadd.f32 %v2065, 1.0
        %v2078 = vadd.f32 %v2066, 1.0
        %v2079 = vadd.f32 %v2067, 1.0
        %v2080 = vadd.f32 %v2068, 1.0
        %v2081 = vadd.f32 %v2069, 1.0
        %v2082 = vadd.f32 %v2070, 1.0
        %v2083 = vadd.f32 %v2071, 1.0
        %v2084 = vmul.f32 %v2072, 0.5
        %v2085 = vmul.f32 %v2073, 0.5
        %v2086 = vmul.f32 %v2074, 0.5
        %v2087 = vmul.f32 %v2075, 0.5
        %v2088 = vmul.f32 %v2076, 0.5
        %v2089 = vmul.f32 %v2077, 0.5
        %v2090 = vmul.f32 %v2078, 0.5
        %v2091 = vmul.f32 %v2079, 0.5
        %v2092 = vmul.f32 %v2080, 0.5
        %v2093 = vmul.f32 %v2081, 0.5
        %v2094 = vmul.f32 %v2082, 0.5
        %v2095 = vmul.f32 %v2083, 0.5
        %v2096 = vmul.f32 %v1933, %v2084
        %v2097 = vmul.f32 %v1935, %v2085
        %v2098 = vmul.f32 %v1984, %v2086
        %v2099 = vmul.f32 %v1986, %v2087
        %v2100 = vmul.f32 %v1937, %v2088
        %v2101 = vmul.f32 %v1939, %v2089
        %v2102 = vmul.f32 %v1988, %v2090
        %v2103 = vmul.f32 %v1990, %v2091
        %v2104 = vmul.f32 %v1943, %v2092
        %v2105 = vmul.f32 %v1945, %v2093
        %v2106 = vmul.f32 %v1994, %v2094
        %v2107 = vmul.f32 %v1996, %v2095
        %v2108 = vpack.c.bf16 %v2100, %v2096
        %v2109 = vpack.c.bf16 %v2101, %v2097
        %v2110 = vpack.c.bf16 %v2102, %v2098
        %v2111 = vpack.c.bf16 %v2103, %v2099
        %v2112 = vpack.c.bf16 %v2104, %v2104
        %v2113 = vpack.c.bf16 %v2105, %v2105
        %v2114 = vpack.c.bf16 %v2106, %v2106
        %v2115 = vpack.c.bf16 %v2107, %v2107
        %v2116 = vld [vmem:[%s15] sm:$0xf]
        %v2117 = vld [vmem:[%s15 + $0x4] sm:$0xf]
        %v2118 = vld [vmem:[%s15 + $0x8] sm:$0xf]
        %v2119 = vld [vmem:[%s15 + $0xc] sm:$0xf]
        %v2120 = vld [vmem:[%s15 + $0x10] sm:$0xf]
        %v2121 = vld [vmem:[%s15 + $0x14] sm:$0xf]
        %v2122 = vld [vmem:[%s15 + $0x18] sm:$0xf]
        %v2123 = vld [vmem:[%s15 + $0x1c] sm:$0xf]
        %v2124 = vld [vmem:[%s15 + $0x20] sm:$0xf]
        %v2125 = vld [vmem:[%s15 + $0x24] sm:$0xf]
        %v2126 = vld [vmem:[%s15 + $0x28] sm:$0xf]
        %v2127 = vld [vmem:[%s15 + $0x2c] sm:$0xf]
        %v2128 = vld [vmem:[%s15 + $0x30] sm:$0xf]
        %v2129 = vld [vmem:[%s15 + $0x34] sm:$0xf]
        %v2130 = vld [vmem:[%s15 + $0x38] sm:$0xf]
        %v2131 = vld [vmem:[%s15 + $0x3c] sm:$0xf]
        %v2132 = vld [vmem:[%s15 + $0x40] sm:$0xf]
        %v2133 = vld [vmem:[%s15 + $0x44] sm:$0xf]
        %v2134 = vld [vmem:[%s15 + $0x48] sm:$0xf]
        %v2135 = vld [vmem:[%s15 + $0x4c] sm:$0xf]
        %v2136 = vld [vmem:[%s15 + $0x50] sm:$0xf]
        %v2137 = vld [vmem:[%s15 + $0x54] sm:$0xf]
        %v2138 = vld [vmem:[%s15 + $0x58] sm:$0xf]
        %v2139 = vld [vmem:[%s15 + $0x5c] sm:$0xf]
        %v2140 = vld [vmem:[%s15 + $0x60] sm:$0xf]
        %v2141 = vld [vmem:[%s15 + $0x64] sm:$0xf]
        %v2142 = vld [vmem:[%s15 + $0x68] sm:$0xf]
        %v2143 = vld [vmem:[%s15 + $0x6c] sm:$0xf]
        %v2144 = vld [vmem:[%s15 + $0x70] sm:$0xf]
        %v2145 = vld [vmem:[%s15 + $0x74] sm:$0xf]
        %v2146 = vld [vmem:[%s15 + $0x78] sm:$0xf]
        %v2147 = vld [vmem:[%s15 + $0x7c] sm:$0xf]
        %v2148 = vld [vmem:[%s15 + $0x80] sm:$0xf]
        %v2149 = vld [vmem:[%s15 + $0x84] sm:$0xf]
        %v2150 = vld [vmem:[%s15 + $0x88] sm:$0xf]
        %v2151 = vld [vmem:[%s15 + $0x8c] sm:$0xf]
        %v2152 = vld [vmem:[%s15 + $0x90] sm:$0xf]
        %v2153 = vld [vmem:[%s15 + $0x94] sm:$0xf]
        %v2154 = vld [vmem:[%s15 + $0x98] sm:$0xf]
        %v2155 = vld [vmem:[%s15 + $0x9c] sm:$0xf]
        %v2156 = vld [vmem:[%s15 + $0xa0] sm:$0xf]
        %v2157 = vld [vmem:[%s15 + $0xa4] sm:$0xf]
        %v2158 = vld [vmem:[%s15 + $0xa8] sm:$0xf]
        %v2159 = vld [vmem:[%s15 + $0xac] sm:$0xf]
        %v2160 = vld [vmem:[%s15 + $0xb0] sm:$0xf]
        %v2161 = vld [vmem:[%s15 + $0xb4] sm:$0xf]
        %v2162 = vld [vmem:[%s15 + $0xb8] sm:$0xf]
        %v2163 = vld [vmem:[%s15 + $0xbc] sm:$0xf]
        %v2164 = vld [vmem:[%s15 + $0xc0] sm:$0xf]
        %v2165 = vld [vmem:[%s15 + $0xc4] sm:$0xf]
        %v2166 = vld [vmem:[%s15 + $0xc8] sm:$0xf]
        %v2167 = vld [vmem:[%s15 + $0xcc] sm:$0xf]
        %v2168 = vld [vmem:[%s15 + $0xd0] sm:$0xf]
        %v2169 = vld [vmem:[%s15 + $0xd4] sm:$0xf]
        %v2170 = vld [vmem:[%s15 + $0xd8] sm:$0xf]
        %v2171 = vld [vmem:[%s15 + $0xdc] sm:$0xf]
        %v2172 = vld [vmem:[%s15 + $0xe0] sm:$0xf]
        %v2173 = vld [vmem:[%s15 + $0xe4] sm:$0xf]
        %v2174 = vld [vmem:[%s15 + $0xe8] sm:$0xf]
        %v2175 = vld [vmem:[%s15 + $0xec] sm:$0xf]
        %v2176 = vld [vmem:[%s15 + $0xf0] sm:$0xf]
        %v2177 = vld [vmem:[%s15 + $0xf4] sm:$0xf]
        %v2178 = vld [vmem:[%s15 + $0xf8] sm:$0xf]
        %v2179 = vld [vmem:[%s15 + $0xfc] sm:$0xf]
        %v2180 = vld [vmem:[%s16] sm:$0x1]
        %v2182 = vlaneseq
        %v2183 = vshrl.u32 %v2182, 7
        %v2184 = vsub.s32 0, %v2183
        %v2185 = vrot.slane %v2180, %v2184
        %v2251 = vunpack.c.l.b16 %v2116
        %v2252 = vunpack.c.l.b16 %v2117
        %v2253 = vunpack.c.l.b16 %v2118
        %v2254 = vunpack.c.l.b16 %v2119
        %v2255 = vunpack.c.l.b16 %v2120
        %v2256 = vunpack.c.l.b16 %v2121
        %v2257 = vunpack.c.l.b16 %v2122
        %v2258 = vunpack.c.l.b16 %v2123
        %v2259 = vunpack.c.l.b16 %v2124
        %v2260 = vunpack.c.l.b16 %v2125
        %v2261 = vunpack.c.l.b16 %v2126
        %v2262 = vunpack.c.l.b16 %v2127
        %v2263 = vunpack.c.l.b16 %v2128
        %v2264 = vunpack.c.l.b16 %v2129
        %v2265 = vunpack.c.l.b16 %v2130
        %v2266 = vunpack.c.l.b16 %v2131
        %v2267 = vunpack.c.l.b16 %v2132
        %v2268 = vunpack.c.l.b16 %v2133
        %v2269 = vunpack.c.l.b16 %v2134
        %v2270 = vunpack.c.l.b16 %v2135
        %v2271 = vunpack.c.l.b16 %v2136
        %v2272 = vunpack.c.l.b16 %v2137
        %v2273 = vunpack.c.l.b16 %v2138
        %v2274 = vunpack.c.l.b16 %v2139
        %v2275 = vunpack.c.l.b16 %v2140
        %v2276 = vunpack.c.l.b16 %v2141
        %v2277 = vunpack.c.l.b16 %v2142
        %v2278 = vunpack.c.l.b16 %v2143
        %v2279 = vunpack.c.l.b16 %v2144
        %v2280 = vunpack.c.l.b16 %v2145
        %v2281 = vunpack.c.l.b16 %v2146
        %v2282 = vunpack.c.l.b16 %v2147
        %v2283 = vunpack.c.l.b16 %v2148
        %v2284 = vunpack.c.l.b16 %v2149
        %v2285 = vunpack.c.l.b16 %v2150
        %v2286 = vunpack.c.l.b16 %v2151
        %v2287 = vunpack.c.l.b16 %v2152
        %v2288 = vunpack.c.l.b16 %v2153
        %v2289 = vunpack.c.l.b16 %v2154
        %v2290 = vunpack.c.l.b16 %v2155
        %v2291 = vunpack.c.l.b16 %v2156
        %v2292 = vunpack.c.l.b16 %v2157
        %v2293 = vunpack.c.l.b16 %v2158
        %v2294 = vunpack.c.l.b16 %v2159
        %v2295 = vunpack.c.l.b16 %v2160
        %v2296 = vunpack.c.l.b16 %v2161
        %v2297 = vunpack.c.l.b16 %v2162
        %v2298 = vunpack.c.l.b16 %v2163
        %v2299 = vunpack.c.l.b16 %v2164
        %v2300 = vunpack.c.l.b16 %v2165
        %v2301 = vunpack.c.l.b16 %v2166
        %v2302 = vunpack.c.l.b16 %v2167
        %v2303 = vunpack.c.l.b16 %v2168
        %v2304 = vunpack.c.l.b16 %v2169
        %v2305 = vunpack.c.l.b16 %v2170
        %v2306 = vunpack.c.l.b16 %v2171
        %v2307 = vunpack.c.l.b16 %v2172
        %v2308 = vunpack.c.l.b16 %v2173
        %v2309 = vunpack.c.l.b16 %v2174
        %v2310 = vunpack.c.l.b16 %v2175
        %v2311 = vunpack.c.l.b16 %v2176
        %v2312 = vunpack.c.l.b16 %v2177
        %v2313 = vunpack.c.l.b16 %v2178
        %v2314 = vunpack.c.l.b16 %v2179
        %v2315 = vpack.c.b16 %v2252, %v2251
        %v2316 = vpack.c.b16 %v2254, %v2253
        %v2317 = vpack.c.b16 %v2256, %v2255
        %v2318 = vpack.c.b16 %v2258, %v2257
        %v2319 = vpack.c.b16 %v2260, %v2259
        %v2320 = vpack.c.b16 %v2262, %v2261
        %v2321 = vpack.c.b16 %v2264, %v2263
        %v2322 = vpack.c.b16 %v2266, %v2265
        %v2323 = vpack.c.b16 %v2268, %v2267
        %v2324 = vpack.c.b16 %v2270, %v2269
        %v2325 = vpack.c.b16 %v2272, %v2271
        %v2326 = vpack.c.b16 %v2274, %v2273
        %v2327 = vpack.c.b16 %v2276, %v2275
        %v2328 = vpack.c.b16 %v2278, %v2277
        %v2329 = vpack.c.b16 %v2280, %v2279
        %v2330 = vpack.c.b16 %v2282, %v2281
        %v2331 = vpack.c.b16 %v2284, %v2283
        %v2332 = vpack.c.b16 %v2286, %v2285
        %v2333 = vpack.c.b16 %v2288, %v2287
        %v2334 = vpack.c.b16 %v2290, %v2289
        %v2335 = vpack.c.b16 %v2292, %v2291
        %v2336 = vpack.c.b16 %v2294, %v2293
        %v2337 = vpack.c.b16 %v2296, %v2295
        %v2338 = vpack.c.b16 %v2298, %v2297
        %v2339 = vpack.c.b16 %v2300, %v2299
        %v2340 = vpack.c.b16 %v2302, %v2301
        %v2341 = vpack.c.b16 %v2304, %v2303
        %v2342 = vpack.c.b16 %v2306, %v2305
        %v2343 = vpack.c.b16 %v2308, %v2307
        %v2344 = vpack.c.b16 %v2310, %v2309
        %v2345 = vpack.c.b16 %v2312, %v2311
        %v2346 = vpack.c.b16 %v2314, %v2313
        %2379 = vmatprep.subr.bf16.mxu0 0
        %2380 = vmatpush1.bf16.msra.mxu0 %v2322
        %2381 = vmatprep.subr.bf16.mxu0 0
        %2382 = vmatpush1.bf16.msra.mxu0 %v2321
        %2383 = vmatprep.subr.bf16.mxu0 0
        %2384 = vmatpush1.bf16.msra.mxu0 %v2320
        %2385 = vmatprep.subr.bf16.mxu0 0
        %2386 = vmatpush1.bf16.msra.mxu0 %v2319
        %2387 = vmatprep.subr.bf16.mxu0 0
        %2388 = vmatpush1.bf16.msra.mxu0 %v2318
        %2389 = vmatprep.subr.bf16.mxu0 0
        %2390 = vmatpush1.bf16.msra.mxu0 %v2317
        %2391 = vmatprep.subr.bf16.mxu0 0
        %2392 = vmatpush1.bf16.msra.mxu0 %v2316
        %2393 = vmatprep.subr.bf16.mxu0 0
        %2394 = vmatpush1.bf16.msra.mxu0 %v2315
        %2395 = vmatprep.subr.bf16.mxu0 0
        %2396 = vmatpush2.bf16.msra.mxu0 %v2330
        %2397 = vmatprep.subr.bf16.mxu0 0
        %2398 = vmatpush2.bf16.msra.mxu0 %v2329
        %2399 = vmatprep.subr.bf16.mxu0 0
        %2400 = vmatpush2.bf16.msra.mxu0 %v2328
        %2401 = vmatprep.subr.bf16.mxu0 0
        %2402 = vmatpush2.bf16.msra.mxu0 %v2327
        %2403 = vmatprep.subr.bf16.mxu0 0
        %2404 = vmatpush2.bf16.msra.mxu0 %v2326
        %2405 = vmatprep.subr.bf16.mxu0 0
        %2406 = vmatpush2.bf16.msra.mxu0 %v2325
        %2407 = vmatprep.subr.bf16.mxu0 0
        %2408 = vmatpush2.bf16.msra.mxu0 %v2324
        %2409 = vmatprep.subr.bf16.mxu0 0
        %2410 = vmatpush2.bf16.msra.mxu0 %v2323
        %2411 = vmatprep.mubr.bf16.mxu0 %v2109
        %2412 = vmatmul.mubr.bf16.gmra.mxu0 %v2108
        %v2413 = vpop.f32.mrf.mxu0
        %v2414 = vadd.f32 %v2185, %v2413
        %v2415 = vpop.f32.mrf.mxu0
        %v2416 = vpop.f32.mrf.mxu0
        %v2417 = vadd.f32 %v2185, %v2416
        %v2418 = vpop.f32.mrf.mxu0
        %2419 = vmatprep.mubr.bf16.mxu0 %v2113
        %2420 = vmatmul.mubr.bf16.gmra.mxu0 %v2112
        %v2421 = vpop.f32.mrf.mxu0
        %v2422 = vadd.f32 %v2185, %v2421
        %v2423 = vpop.f32.mrf.mxu0
        %v2424 = vpop.f32.mrf.mxu0
        %v2425 = vpop.f32.mrf.mxu0
        %2426 = vdwg.mxu0
        %2427 = vmatprep.subr.bf16.mxu0 0
        %2428 = vmatpush1.bf16.msra.mxu0 %v2338
        %2429 = vmatprep.subr.bf16.mxu0 0
        %2430 = vmatpush1.bf16.msra.mxu0 %v2337
        %2431 = vmatprep.subr.bf16.mxu0 0
        %2432 = vmatpush1.bf16.msra.mxu0 %v2336
        %2433 = vmatprep.subr.bf16.mxu0 0
        %2434 = vmatpush1.bf16.msra.mxu0 %v2335
        %2435 = vmatprep.subr.bf16.mxu0 0
        %2436 = vmatpush1.bf16.msra.mxu0 %v2334
        %2437 = vmatprep.subr.bf16.mxu0 0
        %2438 = vmatpush1.bf16.msra.mxu0 %v2333
        %2439 = vmatprep.subr.bf16.mxu0 0
        %2440 = vmatpush1.bf16.msra.mxu0 %v2332
        %2441 = vmatprep.subr.bf16.mxu0 0
        %2442 = vmatpush1.bf16.msra.mxu0 %v2331
        %2443 = vmatprep.subr.bf16.mxu0 0
        %2444 = vmatpush2.bf16.msra.mxu0 %v2346
        %2445 = vmatprep.subr.bf16.mxu0 0
        %2446 = vmatpush2.bf16.msra.mxu0 %v2345
        %2447 = vmatprep.subr.bf16.mxu0 0
        %2448 = vmatpush2.bf16.msra.mxu0 %v2344
        %2449 = vmatprep.subr.bf16.mxu0 0
        %2450 = vmatpush2.bf16.msra.mxu0 %v2343
        %2451 = vmatprep.subr.bf16.mxu0 0
        %2452 = vmatpush2.bf16.msra.mxu0 %v2342
        %2453 = vmatprep.subr.bf16.mxu0 0
        %2454 = vmatpush2.bf16.msra.mxu0 %v2341
        %2455 = vmatprep.subr.bf16.mxu0 0
        %2456 = vmatpush2.bf16.msra.mxu0 %v2340
        %2457 = vmatprep.subr.bf16.mxu0 0
        %2458 = vmatpush2.bf16.msra.mxu0 %v2339
        %2459 = vmatprep.mubr.bf16.mxu0 %v2111
        %2460 = vmatmul.mubr.bf16.gmra.mxu0 %v2110
        %v2461 = vpop.f32.mrf.mxu0
        %v2462 = vadd.f32 %v2414, %v2461
        %v2463 = vpop.f32.mrf.mxu0
        %v2464 = vpop.f32.mrf.mxu0
        %v2465 = vadd.f32 %v2417, %v2464
        %v2466 = vpop.f32.mrf.mxu0
        %2467 = vmatprep.mubr.bf16.mxu0 %v2115
        %2468 = vmatmul.mubr.bf16.gmra.mxu0 %v2114
        %v2469 = vpop.f32.mrf.mxu0
        %v2470 = vadd.f32 %v2422, %v2469
        %v2471 = vpop.f32.mrf.mxu0
        %v2472 = vpop.f32.mrf.mxu0
        %v2473 = vpop.f32.mrf.mxu0
        %2474 = vdwg.mxu0
        %v2475 = vadd.f32 %v1624, %v2462
        %v2476 = vadd.f32 %v1625, %v2465
        %v2477 = vadd.f32 %v1626, %v2470
        %v2478 = vld [vmem:[%s17] sm:$0x1]
        %v2479 = vld [vmem:[%s18] sm:$0x1]
        %2480 = vadd.xlane.f32.xlu0 %v2475
        %v2481 = vpop.xlane.xlu0 %2480
        %2482 = vadd.xlane.f32.xlu0 %v2476
        %v2483 = vpop.xlane.xlu0 %2482
        %v2484 = vsel %vm810, %v2477, 0.0
        %2485 = vadd.xlane.f32.xlu0 %v2484
        %v2486 = vpop.xlane.xlu0 %2485
        %v2487 = vmul.f32 %v2481, %v827
        %v2488 = vmul.f32 %v2483, %v827
        %v2489 = vmul.f32 %v2486, %v827
        %v2490 = vsub.f32 %v2475, %v2487
        %v2491 = vsub.f32 %v2476, %v2488
        %v2492 = vsub.f32 %v2477, %v2489
        %v2493 = vmul.f32 %v2490, %v2490
        %v2494 = vmul.f32 %v2491, %v2491
        %v2495 = vmul.f32 %v2492, %v2492
        %2496 = vadd.xlane.f32.xlu0 %v2493
        %v2497 = vpop.xlane.xlu0 %2496
        %2498 = vadd.xlane.f32.xlu0 %v2494
        %v2499 = vpop.xlane.xlu0 %2498
        %v2500 = vsel %vm810, %v2495, 0.0
        %2501 = vadd.xlane.f32.xlu0 %v2500
        %v2502 = vpop.xlane.xlu0 %2501
        %v2503 = vmul.f32 %v2497, %v827
        %v2504 = vmul.f32 %v2499, %v827
        %v2505 = vmul.f32 %v2502, %v827
        %v2506 = vadd.f32 %v2503, 1e-06
        %v2507 = vadd.f32 %v2504, 1e-06
        %v2508 = vadd.f32 %v2505, 1e-06
        %v2509 = vrsqrt.pop %v2506
        %v2510 = vrsqrt.pop %v2507
        %v2511 = vrsqrt.pop %v2508
        %v2512 = vmul.f32 %v2490, %v2509
        %v2513 = vmul.f32 %v2491, %v2510
        %v2514 = vmul.f32 %v2492, %v2511
        %v2516 = vlaneseq
        %v2517 = vshrl.u32 %v2516, 7
        %v2518 = vsub.s32 0, %v2517
        %v2519 = vrot.slane %v2478, %v2518
        %v2521 = vmul.f32 %v2512, %v2519
        %v2522 = vmul.f32 %v2513, %v2519
        %v2523 = vmul.f32 %v2514, %v2519
        %v2525 = vlaneseq
        %v2526 = vshrl.u32 %v2525, 7
        %v2527 = vsub.s32 0, %v2526
        %v2528 = vrot.slane %v2479, %v2527
        %v2530 = vadd.f32 %v2521, %v2528
        %v2531 = vadd.f32 %v2522, %v2528
        %v2532 = vadd.f32 %v2523, %v2528
        %2533 = vst [vmem:[%s628] sm:$0x1] %v2530
        %2534 = vst [vmem:[%s635 - $0x1] sm:$0xfe] %v2530
        %2535 = vst [vmem:[%s635 + $0x7] sm:$0xff] %v2531
        %2536 = vst [vmem:[%s635 + $0xf] sm:$0x1] %v2532
        %s2537 = sand.u32 %s450, 1
        %s2538 = scalar_lea.sflag [#allocation3], %s2537
        %s2539 = sand.u32 %s450, 1
        %s2540 = scalar_lea.vmem [#allocation2], %s2539
        %s2541 = sand.u32 %s476, 1
        %s2542 = scalar_lea.sflag [#allocation5], %s2541
        %s2543 = sand.u32 %s476, 1
        %s2544 = smul.addr %s2543, 16
        %s2545 = scalar_lea.vmem [#allocation4], %s2544
        // Predicated region
        $region97: #{dino_forward.1} parent=95 // pred_check
          %p2546 = pneg %p460
        $region98: #{dino_forward.1} parent=95 // pred_check_branch
          %2548 = sbr.rel (%p2546) target = $region100
        $region99: #{dino_forward.1} parent=95 // pred_region
          %s2550 = ssub.s32 16, 16
          %2551 = vsyncadd %s2538, %s2550
          %s2552 = smul.addr %s38, 16
          %s2553 = scalar_lea.hbm %s19, %s2552
          %s2555 = sshll.u32 %s2540, 4
          %s2556 = int_to_ptr.vmem [resolvable:$true] %s2555
          %2558 = dma.vmem_to_hbm [thread:$0]  %s2556, 16, %s2553, %s2538
        $region100: #{dino_forward.1} parent=95 // pred_fallthru
          _
        // Predicated region
        $region101: #{dino_forward.1} parent=95 // pred_check
          %p2559 = pneg %p486
        $region102: #{dino_forward.1} parent=95 // pred_check_branch
          %2561 = sbr.rel (%p2559) target = $region104
        $region103: #{dino_forward.1} parent=95 // pred_region
          %s2563 = ssub.s32 256, 256
          %2564 = vsyncadd %s2542, %s2563
          %s2565 = smul.addr %s38, 2
          %s2566 = smul.addr %s2565, 128
          %s2567 = scalar_lea.hbm %s20, %s2566
          %s2568 = sshll.u32 %s2545, 4
          %s2569 = int_to_ptr.vmem [resolvable:$true] %s2568
          %2574 = dma.vmem_to_hbm [thread:$0]  %s2569, 256, %s2567, %s2542, 128, 128, 8
        $region104: #{dino_forward.1} parent=95 // pred_fallthru
          _
      $region96: #{dino_forward.1} parent=5 // pred_fallthru
        _
      %p2575 = scmp.le.s32.totalorder 2, %s33
      // Predicated region
      $region105: #{dino_forward.1} parent=5 // pred_check
        %p2576 = pneg %p2575
      $region106: #{dino_forward.1} parent=5 // pred_check_branch
        %2578 = sbr.rel (%p2576) target = $region108
      $region107: #{dino_forward.1} parent=5 // pred_region
        %s2579 = ssub.s32 %s33, 2
        // Predicated region
        $region109: #{dino_forward.1} parent=107 // pred_check
          %p2580 = pneg %p466
        $region110: #{dino_forward.1} parent=107 // pred_check_branch
          %2582 = sbr.rel (%p2580) target = $region112
        $region111: #{dino_forward.1} parent=107 // pred_region
          %s2583 = sand.u32 %s451, 1
          %s2584 = scalar_lea.sflag [#allocation3], %s2583
          %s2585 = sand.u32 %s451, 1
          %s2586 = scalar_lea.vmem [#allocation2], %s2585
          %2587 = dma.done %s2584, 16
        $region112: #{dino_forward.1} parent=107 // pred_fallthru
          _
        // Predicated region
        $region113: #{dino_forward.1} parent=107 // pred_check
          %p2588 = pneg %p492
        $region114: #{dino_forward.1} parent=107 // pred_check_branch
          %2590 = sbr.rel (%p2588) target = $region116
        $region115: #{dino_forward.1} parent=107 // pred_region
          %s2591 = sand.u32 %s477, 1
          %s2592 = scalar_lea.sflag [#allocation5], %s2591
          %s2593 = sand.u32 %s477, 1
          %s2594 = smul.addr %s2593, 16
          %s2595 = scalar_lea.vmem [#allocation4], %s2594
          %2596 = dma.done %s2592, 256
        $region116: #{dino_forward.1} parent=107 // pred_fallthru
          _
      $region108: #{dino_forward.1} parent=5 // pred_fallthru
        _
    $region6: #{dino_forward.1} parent=1 // loop_footer
      %s37 = sadd.s32 1, %s33
    $region7: #{dino_forward.1} parent=1 // loop_footer_branch
      %32 = sbr.rel target = $region3
    $region8: #{dino_forward.1} parent=1 // loop_exit
      _
    %2597 = vsyncpa [#allocation3], 1
    %s2598 = scalar_lea.sflag [#allocation3], 1
    %2599 = vsyncpa %s2598, 1
    %2600 = vsyncpa [#allocation5], 1
    %s2601 = scalar_lea.sflag [#allocation5], 1
    %2602 = vsyncpa %s2601, 1

</llo_original>
